<compile_context>
chip_gen: v7x
topology: tpu7x:2x2x1
jax: 0.10.0
libtpu: 0.0.40
codegen_flags: <defaults>
</compile_context>

<pallas_src>
import functools

import jax
import jax.numpy as jnp
import numpy as np
from jax import lax
from jax.experimental import pallas as pl
from jax.experimental.pallas import tpu as pltpu

VMEM_SPEC = pl.BlockSpec(memory_space=pltpu.MemorySpace.VMEM)


def _sigmoid(v):
    # One EUP tanh instead of exp + divide; mathematically identical.
    return 0.5 * jnp.tanh(0.5 * v) + 0.5


# ----------------------------------------------------------------------------
# Single fused Pallas kernel
# ----------------------------------------------------------------------------
def fused_vnn_lstm_kernel(*refs, n_gfl, T, N, H):
    """Whole VNNLSTM forward in one kernel.

    refs (in order):
      x      (F0, T*N)        input node signals, lane index = t*N + n
      s_blk  (T*N, T*N)       kron(I_T, S): per-timestep graph shift operator
      per GFL layer l:
        h_l  (K_l, F_{l+1}, F_l)  packed filter taps
        b_l  (F_{l+1}, 1)         bias
      w_mlp (F_L, M), b_mlp (1, M)             readout Linear + LeakyReLU(0.1)
      w_x (M, 4H), w_h (H, 4H), b_lstm (1, 4H) LSTM (gate order i, f, g, o)
      w_out (out, H), b_out (1, out)           final head
      o     (N, out)                           output
    """
    it = iter(refs)
    x_ref = next(it)
    s_ref = next(it)

    s_blk = s_ref[...]                                   # (T*N, T*N)
    z = x_ref[...]                                       # (F0, T*N)

    # ---- Graph filter layers (+ ReLU); all T timesteps batched on lane axis.
    for _ in range(n_gfl):
        h_ref = next(it)                                 # (K, F_out, F_in)
        b_ref = next(it)                                 # (F_out, 1)
        K_l = h_ref.shape[0]
        zk = z
        acc = jnp.dot(h_ref[0], zk, preferred_element_type=jnp.float32)
        for k in range(1, K_l):
            zk = jnp.dot(zk, s_blk, preferred_element_type=jnp.float32)  # x S^k
            acc = acc + jnp.dot(h_ref[k], zk,
                                preferred_element_type=jnp.float32)
        z = jnp.maximum(acc + b_ref[...], 0.0)           # bias + ReLU, (F, T*N)

    wmlp_ref = next(it); bmlp_ref = next(it)
    wx_ref = next(it); wh_ref = next(it); bl_ref = next(it)
    wout_ref = next(it); bout_ref = next(it)
    o_ref = next(it)

    # ---- Readout MLP on (T*N, F) rows: Linear + LeakyReLU(0.1).
    zt = jnp.transpose(z)                                # single 2-D relayout
    y = jnp.dot(zt, wmlp_ref[...],
                preferred_element_type=jnp.float32) + bmlp_ref[...]
    y = jnp.where(y >= 0.0, y, 0.1 * y)                  # (T*N, M)

    # ---- LSTM: input projection for ALL timesteps up front, bias folded once.
    gx = jnp.dot(y, wx_ref[...],
                 preferred_element_type=jnp.float32) + bl_ref[...]   # (T*N, 4H)
    wh = wh_ref[...]

    h = None
    c = None
    for t in range(T):                                   # unrolled; h/c in vregs
        gates = gx[t * N:(t + 1) * N, :]                 # (N, 4H)
        if t > 0:
            gates = gates + jnp.dot(h, wh, preferred_element_type=jnp.float32)
        i = _sigmoid(gates[:, 0 * H:1 * H])
        g = jnp.tanh(gates[:, 2 * H:3 * H])
        o = _sigmoid(gates[:, 3 * H:4 * H])
        ig = i * g
        if t > 0:
            f = _sigmoid(gates[:, 1 * H:2 * H])
            c = f * c + ig
        else:                                            # h0 = c0 = 0
            c = ig
        h = o * jnp.tanh(c)

    # ---- Output head: out_size==1 -> VPU multiply + lane reduction.
    wout_t = wout_ref[...]                               # (out, H)
    if o_ref.shape[1] == 1:
        out = jnp.sum(h * wout_t, axis=1, keepdims=True)
    else:
        out = lax.dot_general(h, wout_t, (((1,), (1,)), ((), ())),
                              preferred_element_type=jnp.float32)
    o_ref[...] = out + bout_ref[...]


# ----------------------------------------------------------------------------
# Wrapper: one pallas_call, weights laid out for lane-dense matmuls
# ----------------------------------------------------------------------------
def vnn_lstm_forward(x, params):
    """x: (F0, T, N)  ->  (N, out_size). Mirrors VNNLSTM.forward exactly."""
    F0, T, N = x.shape
    S = params["S"]
    # Block-diagonal shift operator: applies S per timestep in the (F, T*N)
    # layout.  Constant-folded at compile time when params are closed over.
    s_blk = jnp.kron(jnp.eye(T, dtype=S.dtype), S)       # (T*N, T*N)
    x_flat = x.reshape(F0, T * N)                        # [g, t*N + n] == x[g, t, n]

    args = [x_flat, s_blk]
    for h, b in params["gfl"]:
        args.append(jnp.transpose(h, (1, 0, 2)))         # (K, F_out, F_in) packed taps
        args.append(b)
    args += [params["mlp_w"], params["mlp_b"],
             params["lstm_wx"], params["lstm_wh"], params["lstm_b"],
             params["out_w"].T, params["out_b"]]

    H = params["lstm_wh"].shape[0]
    out_size = params["out_w"].shape[1]
    kernel = functools.partial(fused_vnn_lstm_kernel,
                               n_gfl=len(params["gfl"]), T=T, N=N, H=H)
    return pl.pallas_call(
        kernel,
        out_shape=jax.ShapeDtypeStruct((N, out_size), jnp.float32),
        in_specs=[VMEM_SPEC] * len(args),
        out_specs=VMEM_SPEC,
    )(*args)


# ----------------------------------------------------------------------------
# Pure-JAX reference (for correctness check)
# ----------------------------------------------------------------------------
def reference_forward(x, params):
    S = params["S"]
    z = jnp.transpose(x, (1, 0, 2))
    for h, b in params["gfl"]:
        K = h.shape[1]
        xk = z
        acc = jnp.einsum("fg,tgn->tfn", h[:, 0, :], xk)
        for k in range(1, K):
            xk = jnp.einsum("tgn,nm->tgm", xk, S)
            acc = acc + jnp.einsum("fg,tgn->tfn", h[:, k, :], xk)
        z = jnp.maximum(acc + b[None, :, :], 0.0)
    y = jnp.transpose(z, (0, 2, 1))
    y = y @ params["mlp_w"] + params["mlp_b"]
    y = jnp.where(y >= 0.0, y, 0.1 * y)
    T, N, _ = y.shape
    H = params["lstm_wh"].shape[0]
    h_t = jnp.zeros((N, H), jnp.float32)
    c_t = jnp.zeros((N, H), jnp.float32)
    for t in range(T):
        gates = y[t] @ params["lstm_wx"] + h_t @ params["lstm_wh"] + params["lstm_b"]
        i = jax.nn.sigmoid(gates[:, 0 * H:1 * H])
        f = jax.nn.sigmoid(gates[:, 1 * H:2 * H])
        g = jnp.tanh(gates[:, 2 * H:3 * H])
        o = jax.nn.sigmoid(gates[:, 3 * H:4 * H])
        c_t = f * c_t + i * g
        h_t = o * jnp.tanh(c_t)
    return h_t @ params["out_w"] + params["out_b"]


# ----------------------------------------------------------------------------
# Deterministic parameter / input construction
# ----------------------------------------------------------------------------
def init_params(key, *, N=16, F=(4, 16, 32), K=(3, 2), mlp_out=32, H=32, out_size=1):
    ks = jax.random.split(key, 16)
    A = jax.random.normal(ks[0], (N, N), jnp.float32)
    S = (A + A.T) / (2.0 * jnp.sqrt(N))                 # symmetric GSO

    gfl = []
    idx = 1
    for l in range(len(K)):
        fan = K[l] * F[l]
        h = jax.random.normal(ks[idx], (F[l + 1], K[l], F[l]),
                              jnp.float32) / jnp.sqrt(fan)
        idx += 1
        b = 0.1 * jax.random.normal(ks[idx], (F[l + 1], 1), jnp.float32)
        idx += 1
        gfl.append((h, b))

    mlp_w = jax.random.normal(ks[idx], (F[-1], mlp_out), jnp.float32) / jnp.sqrt(F[-1])
    idx += 1
    mlp_b = jnp.full((1, mlp_out), 0.01, jnp.float32)

    s = 1.0 / jnp.sqrt(H)
    lstm_wx = jax.random.uniform(ks[idx], (mlp_out, 4 * H), jnp.float32, -s, s); idx += 1
    lstm_wh = jax.random.uniform(ks[idx], (H, 4 * H), jnp.float32, -s, s); idx += 1
    lstm_b = jax.random.uniform(ks[idx], (1, 4 * H), jnp.float32, -s, s); idx += 1
    out_w = jax.random.normal(ks[idx], (H, out_size), jnp.float32) / jnp.sqrt(H); idx += 1
    out_b = jnp.full((1, out_size), 0.01, jnp.float32)

    return dict(S=S, gfl=gfl, mlp_w=mlp_w, mlp_b=mlp_b,
                lstm_wx=lstm_wx, lstm_wh=lstm_wh, lstm_b=lstm_b,
                out_w=out_w, out_b=out_b)


if __name__ == "__main__":
    key = jax.random.PRNGKey(0)
    k_param, k_x = jax.random.split(key)

    N_nodes, T, F0 = 16, 8, 4
    params = init_params(k_param, N=N_nodes)
    # VNNLSTM input: (dimFeatures, seq_len, num_nodes) — permuted internally.
    x = jax.random.normal(k_x, (F0, T, N_nodes), jnp.float32)

    fwd = jax.jit(lambda xx: vnn_lstm_forward(xx, params))
    out = jax.block_until_ready(fwd(x))
    assert out.shape == (N_nodes, 1), out.shape

    ref = jax.block_until_ready(reference_forward(x, params))
    np.testing.assert_allclose(np.asarray(out), np.asarray(ref),
                               rtol=2e-3, atol=2e-3)

    print("KERNEL_OK")
</pallas_src>

<mosaic_0001>
module attributes {stable_mosaic.version = 11 : i64} {
  func.func @fused_vnn_lstm_kernel(%arg0: memref<4x128xf32, #tpu.memory_space<vmem>>, %arg1: memref<128x128xf32, #tpu.memory_space<vmem>>, %arg2: memref<3x16x4xf32, #tpu.memory_space<vmem>>, %arg3: memref<16x1xf32, #tpu.memory_space<vmem>>, %arg4: memref<2x32x16xf32, #tpu.memory_space<vmem>>, %arg5: memref<32x1xf32, #tpu.memory_space<vmem>>, %arg6: memref<32x32xf32, #tpu.memory_space<vmem>>, %arg7: memref<1x32xf32, #tpu.memory_space<vmem>>, %arg8: memref<32x128xf32, #tpu.memory_space<vmem>>, %arg9: memref<32x128xf32, #tpu.memory_space<vmem>>, %arg10: memref<1x128xf32, #tpu.memory_space<vmem>>, %arg11: memref<1x32xf32, #tpu.memory_space<vmem>>, %arg12: memref<1x1xf32, #tpu.memory_space<vmem>>, %arg13: memref<16x1xf32, #tpu.memory_space<vmem>>) attributes {dimension_semantics = [], scalar_prefetch = 0 : i64, scratch_operands = 0 : i64, tpu.core_type = #tpu.core_type<tc>} {
    %c0 = arith.constant 0 : index
    %c0_0 = arith.constant 0 : index
    %0 = vector.load %arg1[%c0, %c0_0] : memref<128x128xf32, #tpu.memory_space<vmem>>, vector<128x128xf32>
    %c0_1 = arith.constant 0 : index
    %c0_2 = arith.constant 0 : index
    %1 = vector.load %arg0[%c0_1, %c0_2] : memref<4x128xf32, #tpu.memory_space<vmem>>, vector<4x128xf32>
    %c0_3 = arith.constant 0 : index
    %c0_4 = arith.constant 0 : index
    %c0_5 = arith.constant 0 : index
    %2 = vector.load %arg2[%c0_3, %c0_4, %c0_5] : memref<3x16x4xf32, #tpu.memory_space<vmem>>, vector<1x16x4xf32>
    %3 = vector.shape_cast %2 : vector<1x16x4xf32> to vector<16x4xf32>
    %cst = arith.constant dense<0.000000e+00> : vector<16x128xf32>
    %4 = tpu.matmul %3, %1, %cst {dimension_numbers = #tpu.dot_dimension_numbers<[1], [0], [0], [1], [0, 0, 1, 1], [], []>} : vector<16x4xf32>, vector<4x128xf32>, vector<16x128xf32> -> vector<16x128xf32>
    %cst_6 = arith.constant dense<0.000000e+00> : vector<4x128xf32>
    %5 = tpu.matmul %1, %0, %cst_6 {dimension_numbers = #tpu.dot_dimension_numbers<[1], [0], [0], [1], [0, 0, 1, 1], [], []>} : vector<4x128xf32>, vector<128x128xf32>, vector<4x128xf32> -> vector<4x128xf32>
    %c1 = arith.constant 1 : index
    %c0_7 = arith.constant 0 : index
    %c0_8 = arith.constant 0 : index
    %6 = vector.load %arg2[%c1, %c0_7, %c0_8] : memref<3x16x4xf32, #tpu.memory_space<vmem>>, vector<1x16x4xf32>
    %7 = vector.shape_cast %6 : vector<1x16x4xf32> to vector<16x4xf32>
    %cst_9 = arith.constant dense<0.000000e+00> : vector<16x128xf32>
    %8 = tpu.matmul %7, %5, %cst_9 {dimension_numbers = #tpu.dot_dimension_numbers<[1], [0], [0], [1], [0, 0, 1, 1], [], []>} : vector<16x4xf32>, vector<4x128xf32>, vector<16x128xf32> -> vector<16x128xf32>
    %9 = arith.addf %4, %8 : vector<16x128xf32>
    %cst_10 = arith.constant dense<0.000000e+00> : vector<4x128xf32>
    %10 = tpu.matmul %5, %0, %cst_10 {dimension_numbers = #tpu.dot_dimension_numbers<[1], [0], [0], [1], [0, 0, 1, 1], [], []>} : vector<4x128xf32>, vector<128x128xf32>, vector<4x128xf32> -> vector<4x128xf32>
    %c2 = arith.constant 2 : index
    %c0_11 = arith.constant 0 : index
    %c0_12 = arith.constant 0 : index
    %11 = vector.load %arg2[%c2, %c0_11, %c0_12] : memref<3x16x4xf32, #tpu.memory_space<vmem>>, vector<1x16x4xf32>
    %12 = vector.shape_cast %11 : vector<1x16x4xf32> to vector<16x4xf32>
    %cst_13 = arith.constant dense<0.000000e+00> : vector<16x128xf32>
    %13 = tpu.matmul %12, %10, %cst_13 {dimension_numbers = #tpu.dot_dimension_numbers<[1], [0], [0], [1], [0, 0, 1, 1], [], []>} : vector<16x4xf32>, vector<4x128xf32>, vector<16x128xf32> -> vector<16x128xf32>
    %14 = arith.addf %9, %13 : vector<16x128xf32>
    %c0_14 = arith.constant 0 : index
    %c0_15 = arith.constant 0 : index
    %15 = vector.load %arg3[%c0_14, %c0_15] : memref<16x1xf32, #tpu.memory_space<vmem>>, vector<16x1xf32>
    %16 = vector.broadcast %15 : vector<16x1xf32> to vector<16x128xf32>
    %17 = arith.addf %14, %16 : vector<16x128xf32>
    %cst_16 = arith.constant 0.000000e+00 : f32
    %18 = vector.broadcast %cst_16 : f32 to vector<16x128xf32>
    %19 = arith.maximumf %17, %18 : vector<16x128xf32>
    %c0_17 = arith.constant 0 : index
    %c0_18 = arith.constant 0 : index
    %c0_19 = arith.constant 0 : index
    %20 = vector.load %arg4[%c0_17, %c0_18, %c0_19] : memref<2x32x16xf32, #tpu.memory_space<vmem>>, vector<1x32x16xf32>
    %21 = vector.shape_cast %20 : vector<1x32x16xf32> to vector<32x16xf32>
    %cst_20 = arith.constant dense<0.000000e+00> : vector<32x128xf32>
    %22 = tpu.matmul %21, %19, %cst_20 {dimension_numbers = #tpu.dot_dimension_numbers<[1], [0], [0], [1], [0, 0, 1, 1], [], []>} : vector<32x16xf32>, vector<16x128xf32>, vector<32x128xf32> -> vector<32x128xf32>
    %cst_21 = arith.constant dense<0.000000e+00> : vector<16x128xf32>
    %23 = tpu.matmul %19, %0, %cst_21 {dimension_numbers = #tpu.dot_dimension_numbers<[1], [0], [0], [1], [0, 0, 1, 1], [], []>} : vector<16x128xf32>, vector<128x128xf32>, vector<16x128xf32> -> vector<16x128xf32>
    %c1_22 = arith.constant 1 : index
    %c0_23 = arith.constant 0 : index
    %c0_24 = arith.constant 0 : index
    %24 = vector.load %arg4[%c1_22, %c0_23, %c0_24] : memref<2x32x16xf32, #tpu.memory_space<vmem>>, vector<1x32x16xf32>
    %25 = vector.shape_cast %24 : vector<1x32x16xf32> to vector<32x16xf32>
    %cst_25 = arith.constant dense<0.000000e+00> : vector<32x128xf32>
    %26 = tpu.matmul %25, %23, %cst_25 {dimension_numbers = #tpu.dot_dimension_numbers<[1], [0], [0], [1], [0, 0, 1, 1], [], []>} : vector<32x16xf32>, vector<16x128xf32>, vector<32x128xf32> -> vector<32x128xf32>
    %27 = arith.addf %22, %26 : vector<32x128xf32>
    %c0_26 = arith.constant 0 : index
    %c0_27 = arith.constant 0 : index
    %28 = vector.load %arg5[%c0_26, %c0_27] : memref<32x1xf32, #tpu.memory_space<vmem>>, vector<32x1xf32>
    %29 = vector.broadcast %28 : vector<32x1xf32> to vector<32x128xf32>
    %30 = arith.addf %27, %29 : vector<32x128xf32>
    %cst_28 = arith.constant 0.000000e+00 : f32
    %31 = vector.broadcast %cst_28 : f32 to vector<32x128xf32>
    %32 = arith.maximumf %30, %31 : vector<32x128xf32>
    %33 = tpu.transpose %32, [1, 0] : vector<32x128xf32> -> vector<128x32xf32>
    %c0_29 = arith.constant 0 : index
    %c0_30 = arith.constant 0 : index
    %34 = vector.load %arg6[%c0_29, %c0_30] : memref<32x32xf32, #tpu.memory_space<vmem>>, vector<32x32xf32>
    %cst_31 = arith.constant dense<0.000000e+00> : vector<128x32xf32>
    %35 = tpu.matmul %33, %34, %cst_31 {dimension_numbers = #tpu.dot_dimension_numbers<[1], [0], [0], [1], [0, 0, 1, 1], [], []>} : vector<128x32xf32>, vector<32x32xf32>, vector<128x32xf32> -> vector<128x32xf32>
    %c0_32 = arith.constant 0 : index
    %c0_33 = arith.constant 0 : index
    %36 = vector.load %arg7[%c0_32, %c0_33] : memref<1x32xf32, #tpu.memory_space<vmem>>, vector<1x32xf32>
    %37 = vector.broadcast %36 : vector<1x32xf32> to vector<128x32xf32>
    %38 = arith.addf %35, %37 : vector<128x32xf32>
    %cst_34 = arith.constant 0.000000e+00 : f32
    %39 = vector.broadcast %cst_34 : f32 to vector<128x32xf32>
    %40 = arith.cmpf oge, %38, %39 : vector<128x32xf32>
    %cst_35 = arith.constant 1.000000e-01 : f32
    %41 = vector.broadcast %cst_35 : f32 to vector<128x32xf32>
    %42 = arith.mulf %41, %38 : vector<128x32xf32>
    %43 = arith.select %40, %38, %42 : vector<128x32xi1>, vector<128x32xf32>
    %c0_36 = arith.constant 0 : index
    %c0_37 = arith.constant 0 : index
    %44 = vector.load %arg8[%c0_36, %c0_37] : memref<32x128xf32, #tpu.memory_space<vmem>>, vector<32x128xf32>
    %cst_38 = arith.constant dense<0.000000e+00> : vector<128x128xf32>
    %45 = tpu.matmul %43, %44, %cst_38 {dimension_numbers = #tpu.dot_dimension_numbers<[1], [0], [0], [1], [0, 0, 1, 1], [], []>} : vector<128x32xf32>, vector<32x128xf32>, vector<128x128xf32> -> vector<128x128xf32>
    %c0_39 = arith.constant 0 : index
    %c0_40 = arith.constant 0 : index
    %46 = vector.load %arg10[%c0_39, %c0_40] : memref<1x128xf32, #tpu.memory_space<vmem>>, vector<1x128xf32>
    %47 = vector.broadcast %46 : vector<1x128xf32> to vector<128x128xf32>
    %48 = arith.addf %45, %47 : vector<128x128xf32>
    %c0_41 = arith.constant 0 : index
    %c0_42 = arith.constant 0 : index
    %49 = vector.load %arg9[%c0_41, %c0_42] : memref<32x128xf32, #tpu.memory_space<vmem>>, vector<32x128xf32>
    %50 = vector.extract_strided_slice %48 {offsets = [0, 0], sizes = [16, 128], strides = [1, 1]} : vector<128x128xf32> to vector<16x128xf32>
    %51 = vector.extract_strided_slice %50 {offsets = [0, 0], sizes = [16, 32], strides = [1, 1]} : vector<16x128xf32> to vector<16x32xf32>
    %cst_43 = arith.constant 5.000000e-01 : f32
    %52 = vector.broadcast %cst_43 : f32 to vector<16x32xf32>
    %53 = arith.mulf %52, %51 : vector<16x32xf32>
    %54 = math.tanh %53 : vector<16x32xf32>
    %cst_44 = arith.constant 5.000000e-01 : f32
    %55 = vector.broadcast %cst_44 : f32 to vector<16x32xf32>
    %56 = arith.mulf %55, %54 : vector<16x32xf32>
    %cst_45 = arith.constant 5.000000e-01 : f32
    %57 = vector.broadcast %cst_45 : f32 to vector<16x32xf32>
    %58 = arith.addf %56, %57 : vector<16x32xf32>
    %59 = vector.extract_strided_slice %50 {offsets = [0, 64], sizes = [16, 32], strides = [1, 1]} : vector<16x128xf32> to vector<16x32xf32>
    %60 = math.tanh %59 : vector<16x32xf32>
    %61 = vector.extract_strided_slice %50 {offsets = [0, 96], sizes = [16, 32], strides = [1, 1]} : vector<16x128xf32> to vector<16x32xf32>
    %cst_46 = arith.constant 5.000000e-01 : f32
    %62 = vector.broadcast %cst_46 : f32 to vector<16x32xf32>
    %63 = arith.mulf %62, %61 : vector<16x32xf32>
    %64 = math.tanh %63 : vector<16x32xf32>
    %cst_47 = arith.constant 5.000000e-01 : f32
    %65 = vector.broadcast %cst_47 : f32 to vector<16x32xf32>
    %66 = arith.mulf %65, %64 : vector<16x32xf32>
    %cst_48 = arith.constant 5.000000e-01 : f32
    %67 = vector.broadcast %cst_48 : f32 to vector<16x32xf32>
    %68 = arith.addf %66, %67 : vector<16x32xf32>
    %69 = arith.mulf %58, %60 : vector<16x32xf32>
    %70 = math.tanh %69 : vector<16x32xf32>
    %71 = arith.mulf %68, %70 : vector<16x32xf32>
    %72 = vector.extract_strided_slice %48 {offsets = [16, 0], sizes = [16, 128], strides = [1, 1]} : vector<128x128xf32> to vector<16x128xf32>
    %cst_49 = arith.constant dense<0.000000e+00> : vector<16x128xf32>
    %73 = tpu.matmul %71, %49, %cst_49 {dimension_numbers = #tpu.dot_dimension_numbers<[1], [0], [0], [1], [0, 0, 1, 1], [], []>} : vector<16x32xf32>, vector<32x128xf32>, vector<16x128xf32> -> vector<16x128xf32>
    %74 = arith.addf %72, %73 : vector<16x128xf32>
    %75 = vector.extract_strided_slice %74 {offsets = [0, 0], sizes = [16, 32], strides = [1, 1]} : vector<16x128xf32> to vector<16x32xf32>
    %cst_50 = arith.constant 5.000000e-01 : f32
    %76 = vector.broadcast %cst_50 : f32 to vector<16x32xf32>
    %77 = arith.mulf %76, %75 : vector<16x32xf32>
    %78 = math.tanh %77 : vector<16x32xf32>
    %cst_51 = arith.constant 5.000000e-01 : f32
    %79 = vector.broadcast %cst_51 : f32 to vector<16x32xf32>
    %80 = arith.mulf %79, %78 : vector<16x32xf32>
    %cst_52 = arith.constant 5.000000e-01 : f32
    %81 = vector.broadcast %cst_52 : f32 to vector<16x32xf32>
    %82 = arith.addf %80, %81 : vector<16x32xf32>
    %83 = vector.extract_strided_slice %74 {offsets = [0, 64], sizes = [16, 32], strides = [1, 1]} : vector<16x128xf32> to vector<16x32xf32>
    %84 = math.tanh %83 : vector<16x32xf32>
    %85 = vector.extract_strided_slice %74 {offsets = [0, 96], sizes = [16, 32], strides = [1, 1]} : vector<16x128xf32> to vector<16x32xf32>
    %cst_53 = arith.constant 5.000000e-01 : f32
    %86 = vector.broadcast %cst_53 : f32 to vector<16x32xf32>
    %87 = arith.mulf %86, %85 : vector<16x32xf32>
    %88 = math.tanh %87 : vector<16x32xf32>
    %cst_54 = arith.constant 5.000000e-01 : f32
    %89 = vector.broadcast %cst_54 : f32 to vector<16x32xf32>
    %90 = arith.mulf %89, %88 : vector<16x32xf32>
    %cst_55 = arith.constant 5.000000e-01 : f32
    %91 = vector.broadcast %cst_55 : f32 to vector<16x32xf32>
    %92 = arith.addf %90, %91 : vector<16x32xf32>
    %93 = arith.mulf %82, %84 : vector<16x32xf32>
    %94 = vector.extract_strided_slice %74 {offsets = [0, 32], sizes = [16, 32], strides = [1, 1]} : vector<16x128xf32> to vector<16x32xf32>
    %cst_56 = arith.constant 5.000000e-01 : f32
    %95 = vector.broadcast %cst_56 : f32 to vector<16x32xf32>
    %96 = arith.mulf %95, %94 : vector<16x32xf32>
    %97 = math.tanh %96 : vector<16x32xf32>
    %cst_57 = arith.constant 5.000000e-01 : f32
    %98 = vector.broadcast %cst_57 : f32 to vector<16x32xf32>
    %99 = arith.mulf %98, %97 : vector<16x32xf32>
    %cst_58 = arith.constant 5.000000e-01 : f32
    %100 = vector.broadcast %cst_58 : f32 to vector<16x32xf32>
    %101 = arith.addf %99, %100 : vector<16x32xf32>
    %102 = arith.mulf %101, %69 : vector<16x32xf32>
    %103 = arith.addf %102, %93 : vector<16x32xf32>
    %104 = math.tanh %103 : vector<16x32xf32>
    %105 = arith.mulf %92, %104 : vector<16x32xf32>
    %106 = vector.extract_strided_slice %48 {offsets = [32, 0], sizes = [16, 128], strides = [1, 1]} : vector<128x128xf32> to vector<16x128xf32>
    %cst_59 = arith.constant dense<0.000000e+00> : vector<16x128xf32>
    %107 = tpu.matmul %105, %49, %cst_59 {dimension_numbers = #tpu.dot_dimension_numbers<[1], [0], [0], [1], [0, 0, 1, 1], [], []>} : vector<16x32xf32>, vector<32x128xf32>, vector<16x128xf32> -> vector<16x128xf32>
    %108 = arith.addf %106, %107 : vector<16x128xf32>
    %109 = vector.extract_strided_slice %108 {offsets = [0, 0], sizes = [16, 32], strides = [1, 1]} : vector<16x128xf32> to vector<16x32xf32>
    %cst_60 = arith.constant 5.000000e-01 : f32
    %110 = vector.broadcast %cst_60 : f32 to vector<16x32xf32>
    %111 = arith.mulf %110, %109 : vector<16x32xf32>
    %112 = math.tanh %111 : vector<16x32xf32>
    %cst_61 = arith.constant 5.000000e-01 : f32
    %113 = vector.broadcast %cst_61 : f32 to vector<16x32xf32>
    %114 = arith.mulf %113, %112 : vector<16x32xf32>
    %cst_62 = arith.constant 5.000000e-01 : f32
    %115 = vector.broadcast %cst_62 : f32 to vector<16x32xf32>
    %116 = arith.addf %114, %115 : vector<16x32xf32>
    %117 = vector.extract_strided_slice %108 {offsets = [0, 64], sizes = [16, 32], strides = [1, 1]} : vector<16x128xf32> to vector<16x32xf32>
    %118 = math.tanh %117 : vector<16x32xf32>
    %119 = vector.extract_strided_slice %108 {offsets = [0, 96], sizes = [16, 32], strides = [1, 1]} : vector<16x128xf32> to vector<16x32xf32>
    %cst_63 = arith.constant 5.000000e-01 : f32
    %120 = vector.broadcast %cst_63 : f32 to vector<16x32xf32>
    %121 = arith.mulf %120, %119 : vector<16x32xf32>
    %122 = math.tanh %121 : vector<16x32xf32>
    %cst_64 = arith.constant 5.000000e-01 : f32
    %123 = vector.broadcast %cst_64 : f32 to vector<16x32xf32>
    %124 = arith.mulf %123, %122 : vector<16x32xf32>
    %cst_65 = arith.constant 5.000000e-01 : f32
    %125 = vector.broadcast %cst_65 : f32 to vector<16x32xf32>
    %126 = arith.addf %124, %125 : vector<16x32xf32>
    %127 = arith.mulf %116, %118 : vector<16x32xf32>
    %128 = vector.extract_strided_slice %108 {offsets = [0, 32], sizes = [16, 32], strides = [1, 1]} : vector<16x128xf32> to vector<16x32xf32>
    %cst_66 = arith.constant 5.000000e-01 : f32
    %129 = vector.broadcast %cst_66 : f32 to vector<16x32xf32>
    %130 = arith.mulf %129, %128 : vector<16x32xf32>
    %131 = math.tanh %130 : vector<16x32xf32>
    %cst_67 = arith.constant 5.000000e-01 : f32
    %132 = vector.broadcast %cst_67 : f32 to vector<16x32xf32>
    %133 = arith.mulf %132, %131 : vector<16x32xf32>
    %cst_68 = arith.constant 5.000000e-01 : f32
    %134 = vector.broadcast %cst_68 : f32 to vector<16x32xf32>
    %135 = arith.addf %133, %134 : vector<16x32xf32>
    %136 = arith.mulf %135, %103 : vector<16x32xf32>
    %137 = arith.addf %136, %127 : vector<16x32xf32>
    %138 = math.tanh %137 : vector<16x32xf32>
    %139 = arith.mulf %126, %138 : vector<16x32xf32>
    %140 = vector.extract_strided_slice %48 {offsets = [48, 0], sizes = [16, 128], strides = [1, 1]} : vector<128x128xf32> to vector<16x128xf32>
    %cst_69 = arith.constant dense<0.000000e+00> : vector<16x128xf32>
    %141 = tpu.matmul %139, %49, %cst_69 {dimension_numbers = #tpu.dot_dimension_numbers<[1], [0], [0], [1], [0, 0, 1, 1], [], []>} : vector<16x32xf32>, vector<32x128xf32>, vector<16x128xf32> -> vector<16x128xf32>
    %142 = arith.addf %140, %141 : vector<16x128xf32>
    %143 = vector.extract_strided_slice %142 {offsets = [0, 0], sizes = [16, 32], strides = [1, 1]} : vector<16x128xf32> to vector<16x32xf32>
    %cst_70 = arith.constant 5.000000e-01 : f32
    %144 = vector.broadcast %cst_70 : f32 to vector<16x32xf32>
    %145 = arith.mulf %144, %143 : vector<16x32xf32>
    %146 = math.tanh %145 : vector<16x32xf32>
    %cst_71 = arith.constant 5.000000e-01 : f32
    %147 = vector.broadcast %cst_71 : f32 to vector<16x32xf32>
    %148 = arith.mulf %147, %146 : vector<16x32xf32>
    %cst_72 = arith.constant 5.000000e-01 : f32
    %149 = vector.broadcast %cst_72 : f32 to vector<16x32xf32>
    %150 = arith.addf %148, %149 : vector<16x32xf32>
    %151 = vector.extract_strided_slice %142 {offsets = [0, 64], sizes = [16, 32], strides = [1, 1]} : vector<16x128xf32> to vector<16x32xf32>
    %152 = math.tanh %151 : vector<16x32xf32>
    %153 = vector.extract_strided_slice %142 {offsets = [0, 96], sizes = [16, 32], strides = [1, 1]} : vector<16x128xf32> to vector<16x32xf32>
    %cst_73 = arith.constant 5.000000e-01 : f32
    %154 = vector.broadcast %cst_73 : f32 to vector<16x32xf32>
    %155 = arith.mulf %154, %153 : vector<16x32xf32>
    %156 = math.tanh %155 : vector<16x32xf32>
    %cst_74 = arith.constant 5.000000e-01 : f32
    %157 = vector.broadcast %cst_74 : f32 to vector<16x32xf32>
    %158 = arith.mulf %157, %156 : vector<16x32xf32>
    %cst_75 = arith.constant 5.000000e-01 : f32
    %159 = vector.broadcast %cst_75 : f32 to vector<16x32xf32>
    %160 = arith.addf %158, %159 : vector<16x32xf32>
    %161 = arith.mulf %150, %152 : vector<16x32xf32>
    %162 = vector.extract_strided_slice %142 {offsets = [0, 32], sizes = [16, 32], strides = [1, 1]} : vector<16x128xf32> to vector<16x32xf32>
    %cst_76 = arith.constant 5.000000e-01 : f32
    %163 = vector.broadcast %cst_76 : f32 to vector<16x32xf32>
    %164 = arith.mulf %163, %162 : vector<16x32xf32>
    %165 = math.tanh %164 : vector<16x32xf32>
    %cst_77 = arith.constant 5.000000e-01 : f32
    %166 = vector.broadcast %cst_77 : f32 to vector<16x32xf32>
    %167 = arith.mulf %166, %165 : vector<16x32xf32>
    %cst_78 = arith.constant 5.000000e-01 : f32
    %168 = vector.broadcast %cst_78 : f32 to vector<16x32xf32>
    %169 = arith.addf %167, %168 : vector<16x32xf32>
    %170 = arith.mulf %169, %137 : vector<16x32xf32>
    %171 = arith.addf %170, %161 : vector<16x32xf32>
    %172 = math.tanh %171 : vector<16x32xf32>
    %173 = arith.mulf %160, %172 : vector<16x32xf32>
    %174 = vector.extract_strided_slice %48 {offsets = [64, 0], sizes = [16, 128], strides = [1, 1]} : vector<128x128xf32> to vector<16x128xf32>
    %cst_79 = arith.constant dense<0.000000e+00> : vector<16x128xf32>
    %175 = tpu.matmul %173, %49, %cst_79 {dimension_numbers = #tpu.dot_dimension_numbers<[1], [0], [0], [1], [0, 0, 1, 1], [], []>} : vector<16x32xf32>, vector<32x128xf32>, vector<16x128xf32> -> vector<16x128xf32>
    %176 = arith.addf %174, %175 : vector<16x128xf32>
    %177 = vector.extract_strided_slice %176 {offsets = [0, 0], sizes = [16, 32], strides = [1, 1]} : vector<16x128xf32> to vector<16x32xf32>
    %cst_80 = arith.constant 5.000000e-01 : f32
    %178 = vector.broadcast %cst_80 : f32 to vector<16x32xf32>
    %179 = arith.mulf %178, %177 : vector<16x32xf32>
    %180 = math.tanh %179 : vector<16x32xf32>
    %cst_81 = arith.constant 5.000000e-01 : f32
    %181 = vector.broadcast %cst_81 : f32 to vector<16x32xf32>
    %182 = arith.mulf %181, %180 : vector<16x32xf32>
    %cst_82 = arith.constant 5.000000e-01 : f32
    %183 = vector.broadcast %cst_82 : f32 to vector<16x32xf32>
    %184 = arith.addf %182, %183 : vector<16x32xf32>
    %185 = vector.extract_strided_slice %176 {offsets = [0, 64], sizes = [16, 32], strides = [1, 1]} : vector<16x128xf32> to vector<16x32xf32>
    %186 = math.tanh %185 : vector<16x32xf32>
    %187 = vector.extract_strided_slice %176 {offsets = [0, 96], sizes = [16, 32], strides = [1, 1]} : vector<16x128xf32> to vector<16x32xf32>
    %cst_83 = arith.constant 5.000000e-01 : f32
    %188 = vector.broadcast %cst_83 : f32 to vector<16x32xf32>
    %189 = arith.mulf %188, %187 : vector<16x32xf32>
    %190 = math.tanh %189 : vector<16x32xf32>
    %cst_84 = arith.constant 5.000000e-01 : f32
    %191 = vector.broadcast %cst_84 : f32 to vector<16x32xf32>
    %192 = arith.mulf %191, %190 : vector<16x32xf32>
    %cst_85 = arith.constant 5.000000e-01 : f32
    %193 = vector.broadcast %cst_85 : f32 to vector<16x32xf32>
    %194 = arith.addf %192, %193 : vector<16x32xf32>
    %195 = arith.mulf %184, %186 : vector<16x32xf32>
    %196 = vector.extract_strided_slice %176 {offsets = [0, 32], sizes = [16, 32], strides = [1, 1]} : vector<16x128xf32> to vector<16x32xf32>
    %cst_86 = arith.constant 5.000000e-01 : f32
    %197 = vector.broadcast %cst_86 : f32 to vector<16x32xf32>
    %198 = arith.mulf %197, %196 : vector<16x32xf32>
    %199 = math.tanh %198 : vector<16x32xf32>
    %cst_87 = arith.constant 5.000000e-01 : f32
    %200 = vector.broadcast %cst_87 : f32 to vector<16x32xf32>
    %201 = arith.mulf %200, %199 : vector<16x32xf32>
    %cst_88 = arith.constant 5.000000e-01 : f32
    %202 = vector.broadcast %cst_88 : f32 to vector<16x32xf32>
    %203 = arith.addf %201, %202 : vector<16x32xf32>
    %204 = arith.mulf %203, %171 : vector<16x32xf32>
    %205 = arith.addf %204, %195 : vector<16x32xf32>
    %206 = math.tanh %205 : vector<16x32xf32>
    %207 = arith.mulf %194, %206 : vector<16x32xf32>
    %208 = vector.extract_strided_slice %48 {offsets = [80, 0], sizes = [16, 128], strides = [1, 1]} : vector<128x128xf32> to vector<16x128xf32>
    %cst_89 = arith.constant dense<0.000000e+00> : vector<16x128xf32>
    %209 = tpu.matmul %207, %49, %cst_89 {dimension_numbers = #tpu.dot_dimension_numbers<[1], [0], [0], [1], [0, 0, 1, 1], [], []>} : vector<16x32xf32>, vector<32x128xf32>, vector<16x128xf32> -> vector<16x128xf32>
    %210 = arith.addf %208, %209 : vector<16x128xf32>
    %211 = vector.extract_strided_slice %210 {offsets = [0, 0], sizes = [16, 32], strides = [1, 1]} : vector<16x128xf32> to vector<16x32xf32>
    %cst_90 = arith.constant 5.000000e-01 : f32
    %212 = vector.broadcast %cst_90 : f32 to vector<16x32xf32>
    %213 = arith.mulf %212, %211 : vector<16x32xf32>
    %214 = math.tanh %213 : vector<16x32xf32>
    %cst_91 = arith.constant 5.000000e-01 : f32
    %215 = vector.broadcast %cst_91 : f32 to vector<16x32xf32>
    %216 = arith.mulf %215, %214 : vector<16x32xf32>
    %cst_92 = arith.constant 5.000000e-01 : f32
    %217 = vector.broadcast %cst_92 : f32 to vector<16x32xf32>
    %218 = arith.addf %216, %217 : vector<16x32xf32>
    %219 = vector.extract_strided_slice %210 {offsets = [0, 64], sizes = [16, 32], strides = [1, 1]} : vector<16x128xf32> to vector<16x32xf32>
    %220 = math.tanh %219 : vector<16x32xf32>
    %221 = vector.extract_strided_slice %210 {offsets = [0, 96], sizes = [16, 32], strides = [1, 1]} : vector<16x128xf32> to vector<16x32xf32>
    %cst_93 = arith.constant 5.000000e-01 : f32
    %222 = vector.broadcast %cst_93 : f32 to vector<16x32xf32>
    %223 = arith.mulf %222, %221 : vector<16x32xf32>
    %224 = math.tanh %223 : vector<16x32xf32>
    %cst_94 = arith.constant 5.000000e-01 : f32
    %225 = vector.broadcast %cst_94 : f32 to vector<16x32xf32>
    %226 = arith.mulf %225, %224 : vector<16x32xf32>
    %cst_95 = arith.constant 5.000000e-01 : f32
    %227 = vector.broadcast %cst_95 : f32 to vector<16x32xf32>
    %228 = arith.addf %226, %227 : vector<16x32xf32>
    %229 = arith.mulf %218, %220 : vector<16x32xf32>
    %230 = vector.extract_strided_slice %210 {offsets = [0, 32], sizes = [16, 32], strides = [1, 1]} : vector<16x128xf32> to vector<16x32xf32>
    %cst_96 = arith.constant 5.000000e-01 : f32
    %231 = vector.broadcast %cst_96 : f32 to vector<16x32xf32>
    %232 = arith.mulf %231, %230 : vector<16x32xf32>
    %233 = math.tanh %232 : vector<16x32xf32>
    %cst_97 = arith.constant 5.000000e-01 : f32
    %234 = vector.broadcast %cst_97 : f32 to vector<16x32xf32>
    %235 = arith.mulf %234, %233 : vector<16x32xf32>
    %cst_98 = arith.constant 5.000000e-01 : f32
    %236 = vector.broadcast %cst_98 : f32 to vector<16x32xf32>
    %237 = arith.addf %235, %236 : vector<16x32xf32>
    %238 = arith.mulf %237, %205 : vector<16x32xf32>
    %239 = arith.addf %238, %229 : vector<16x32xf32>
    %240 = math.tanh %239 : vector<16x32xf32>
    %241 = arith.mulf %228, %240 : vector<16x32xf32>
    %242 = vector.extract_strided_slice %48 {offsets = [96, 0], sizes = [16, 128], strides = [1, 1]} : vector<128x128xf32> to vector<16x128xf32>
    %cst_99 = arith.constant dense<0.000000e+00> : vector<16x128xf32>
    %243 = tpu.matmul %241, %49, %cst_99 {dimension_numbers = #tpu.dot_dimension_numbers<[1], [0], [0], [1], [0, 0, 1, 1], [], []>} : vector<16x32xf32>, vector<32x128xf32>, vector<16x128xf32> -> vector<16x128xf32>
    %244 = arith.addf %242, %243 : vector<16x128xf32>
    %245 = vector.extract_strided_slice %244 {offsets = [0, 0], sizes = [16, 32], strides = [1, 1]} : vector<16x128xf32> to vector<16x32xf32>
    %cst_100 = arith.constant 5.000000e-01 : f32
    %246 = vector.broadcast %cst_100 : f32 to vector<16x32xf32>
    %247 = arith.mulf %246, %245 : vector<16x32xf32>
    %248 = math.tanh %247 : vector<16x32xf32>
    %cst_101 = arith.constant 5.000000e-01 : f32
    %249 = vector.broadcast %cst_101 : f32 to vector<16x32xf32>
    %250 = arith.mulf %249, %248 : vector<16x32xf32>
    %cst_102 = arith.constant 5.000000e-01 : f32
    %251 = vector.broadcast %cst_102 : f32 to vector<16x32xf32>
    %252 = arith.addf %250, %251 : vector<16x32xf32>
    %253 = vector.extract_strided_slice %244 {offsets = [0, 64], sizes = [16, 32], strides = [1, 1]} : vector<16x128xf32> to vector<16x32xf32>
    %254 = math.tanh %253 : vector<16x32xf32>
    %255 = vector.extract_strided_slice %244 {offsets = [0, 96], sizes = [16, 32], strides = [1, 1]} : vector<16x128xf32> to vector<16x32xf32>
    %cst_103 = arith.constant 5.000000e-01 : f32
    %256 = vector.broadcast %cst_103 : f32 to vector<16x32xf32>
    %257 = arith.mulf %256, %255 : vector<16x32xf32>
    %258 = math.tanh %257 : vector<16x32xf32>
    %cst_104 = arith.constant 5.000000e-01 : f32
    %259 = vector.broadcast %cst_104 : f32 to vector<16x32xf32>
    %260 = arith.mulf %259, %258 : vector<16x32xf32>
    %cst_105 = arith.constant 5.000000e-01 : f32
    %261 = vector.broadcast %cst_105 : f32 to vector<16x32xf32>
    %262 = arith.addf %260, %261 : vector<16x32xf32>
    %263 = arith.mulf %252, %254 : vector<16x32xf32>
    %264 = vector.extract_strided_slice %244 {offsets = [0, 32], sizes = [16, 32], strides = [1, 1]} : vector<16x128xf32> to vector<16x32xf32>
    %cst_106 = arith.constant 5.000000e-01 : f32
    %265 = vector.broadcast %cst_106 : f32 to vector<16x32xf32>
    %266 = arith.mulf %265, %264 : vector<16x32xf32>
    %267 = math.tanh %266 : vector<16x32xf32>
    %cst_107 = arith.constant 5.000000e-01 : f32
    %268 = vector.broadcast %cst_107 : f32 to vector<16x32xf32>
    %269 = arith.mulf %268, %267 : vector<16x32xf32>
    %cst_108 = arith.constant 5.000000e-01 : f32
    %270 = vector.broadcast %cst_108 : f32 to vector<16x32xf32>
    %271 = arith.addf %269, %270 : vector<16x32xf32>
    %272 = arith.mulf %271, %239 : vector<16x32xf32>
    %273 = arith.addf %272, %263 : vector<16x32xf32>
    %274 = math.tanh %273 : vector<16x32xf32>
    %275 = arith.mulf %262, %274 : vector<16x32xf32>
    %276 = vector.extract_strided_slice %48 {offsets = [112, 0], sizes = [16, 128], strides = [1, 1]} : vector<128x128xf32> to vector<16x128xf32>
    %cst_109 = arith.constant dense<0.000000e+00> : vector<16x128xf32>
    %277 = tpu.matmul %275, %49, %cst_109 {dimension_numbers = #tpu.dot_dimension_numbers<[1], [0], [0], [1], [0, 0, 1, 1], [], []>} : vector<16x32xf32>, vector<32x128xf32>, vector<16x128xf32> -> vector<16x128xf32>
    %278 = arith.addf %276, %277 : vector<16x128xf32>
    %279 = vector.extract_strided_slice %278 {offsets = [0, 0], sizes = [16, 32], strides = [1, 1]} : vector<16x128xf32> to vector<16x32xf32>
    %cst_110 = arith.constant 5.000000e-01 : f32
    %280 = vector.broadcast %cst_110 : f32 to vector<16x32xf32>
    %281 = arith.mulf %280, %279 : vector<16x32xf32>
    %282 = math.tanh %281 : vector<16x32xf32>
    %cst_111 = arith.constant 5.000000e-01 : f32
    %283 = vector.broadcast %cst_111 : f32 to vector<16x32xf32>
    %284 = arith.mulf %283, %282 : vector<16x32xf32>
    %cst_112 = arith.constant 5.000000e-01 : f32
    %285 = vector.broadcast %cst_112 : f32 to vector<16x32xf32>
    %286 = arith.addf %284, %285 : vector<16x32xf32>
    %287 = vector.extract_strided_slice %278 {offsets = [0, 64], sizes = [16, 32], strides = [1, 1]} : vector<16x128xf32> to vector<16x32xf32>
    %288 = math.tanh %287 : vector<16x32xf32>
    %289 = vector.extract_strided_slice %278 {offsets = [0, 96], sizes = [16, 32], strides = [1, 1]} : vector<16x128xf32> to vector<16x32xf32>
    %cst_113 = arith.constant 5.000000e-01 : f32
    %290 = vector.broadcast %cst_113 : f32 to vector<16x32xf32>
    %291 = arith.mulf %290, %289 : vector<16x32xf32>
    %292 = math.tanh %291 : vector<16x32xf32>
    %cst_114 = arith.constant 5.000000e-01 : f32
    %293 = vector.broadcast %cst_114 : f32 to vector<16x32xf32>
    %294 = arith.mulf %293, %292 : vector<16x32xf32>
    %cst_115 = arith.constant 5.000000e-01 : f32
    %295 = vector.broadcast %cst_115 : f32 to vector<16x32xf32>
    %296 = arith.addf %294, %295 : vector<16x32xf32>
    %297 = arith.mulf %286, %288 : vector<16x32xf32>
    %298 = vector.extract_strided_slice %278 {offsets = [0, 32], sizes = [16, 32], strides = [1, 1]} : vector<16x128xf32> to vector<16x32xf32>
    %cst_116 = arith.constant 5.000000e-01 : f32
    %299 = vector.broadcast %cst_116 : f32 to vector<16x32xf32>
    %300 = arith.mulf %299, %298 : vector<16x32xf32>
    %301 = math.tanh %300 : vector<16x32xf32>
    %cst_117 = arith.constant 5.000000e-01 : f32
    %302 = vector.broadcast %cst_117 : f32 to vector<16x32xf32>
    %303 = arith.mulf %302, %301 : vector<16x32xf32>
    %cst_118 = arith.constant 5.000000e-01 : f32
    %304 = vector.broadcast %cst_118 : f32 to vector<16x32xf32>
    %305 = arith.addf %303, %304 : vector<16x32xf32>
    %306 = arith.mulf %305, %273 : vector<16x32xf32>
    %307 = arith.addf %306, %297 : vector<16x32xf32>
    %308 = math.tanh %307 : vector<16x32xf32>
    %309 = arith.mulf %296, %308 : vector<16x32xf32>
    %c0_119 = arith.constant 0 : index
    %c0_120 = arith.constant 0 : index
    %310 = vector.load %arg11[%c0_119, %c0_120] : memref<1x32xf32, #tpu.memory_space<vmem>>, vector<1x32xf32>
    %311 = vector.broadcast %310 : vector<1x32xf32> to vector<16x32xf32>
    %312 = arith.mulf %309, %311 : vector<16x32xf32>
    %cst_121 = arith.constant dense<0.000000e+00> : vector<16xf32>
    %313 = vector.multi_reduction <add>, %312, %cst_121 [1] : vector<16x32xf32> to vector<16xf32>
    %314 = vector.shape_cast %313 : vector<16xf32> to vector<16x1xf32>
    %c0_122 = arith.constant 0 : index
    %c0_123 = arith.constant 0 : index
    %315 = vector.load %arg12[%c0_122, %c0_123] : memref<1x1xf32, #tpu.memory_space<vmem>>, vector<1x1xf32>
    %316 = vector.broadcast %315 : vector<1x1xf32> to vector<16x1xf32>
    %317 = arith.addf %314, %316 : vector<16x1xf32>
    %c0_124 = arith.constant 0 : index
    %c0_125 = arith.constant 0 : index
    %318 = vector.load %arg13[%c0_124, %c0_125] : memref<16x1xf32, #tpu.memory_space<vmem>>, vector<16x1xf32>
    tpu.vector_store %arg13[%c0_124, %c0_125], %317 {strides = array<i32>} : memref<16x1xf32, #tpu.memory_space<vmem>>, vector<16x1xf32>,
    return
  }
}

</mosaic_0001>

<llo_original>
// kernel: _lambda_.1
$region0: #{_lambda_.1}
  #allocation0 [shape = 'u32[]', space=smem, size = 0x4, offset = 0x4, fixed_abs, tag = 'smem constant byte address 0x4 - core index']
  #allocation1 [shape = 'u32[144,128]{1,0:T(1,128)}', space=vmem, size = 0x12000, scoped, tag = 'internal scratch']
  #allocation2 [shape = 'f32[1,1]{1,0:T(1,128)S(1)}', space=vmem, size = 0x200, scoped, tag = 'scoped memory for _lambda_.1']
  %s0 = inlined_call_operand.vmem [shape: f32[4,128], index: 0, kind: input, shape index: {}]
  %s1 = inlined_call_operand.vmem [shape: f32[128,128], index: 1, kind: input, shape index: {}]
  %s2 = inlined_call_operand.vmem [shape: f32[3,16,4], index: 2, kind: input, shape index: {}]
  %s3 = inlined_call_operand.vmem [shape: f32[16,1], index: 3, kind: input, shape index: {}]
  %s4 = inlined_call_operand.vmem [shape: f32[2,32,16], index: 4, kind: input, shape index: {}]
  %s5 = inlined_call_operand.vmem [shape: f32[32,1], index: 5, kind: input, shape index: {}]
  %s6 = inlined_call_operand.vmem [shape: f32[32,32], index: 6, kind: input, shape index: {}]
  %s7 = inlined_call_operand.vmem [shape: f32[1,32], index: 7, kind: input, shape index: {}]
  %s8 = inlined_call_operand.vmem [shape: f32[32,128], index: 8, kind: input, shape index: {}]
  %s9 = inlined_call_operand.vmem [shape: f32[32,128], index: 9, kind: input, shape index: {}]
  %s10 = inlined_call_operand.vmem [shape: f32[1,128], index: 10, kind: input, shape index: {}]
  %s11 = inlined_call_operand.vmem [shape: f32[1,32], index: 11, kind: input, shape index: {}]
  %s12 = inlined_call_operand.<no memory space> [shape: f32[1,1], index: 12, kind: input, shape index: {}]
  %s13 = inlined_call_operand.vmem [shape: f32[16,1], index: 13, kind: output, shape index: {}]
  %s14 = sld [smem:[#allocation0]]
  $region62: #{_lambda_.1} parent=0
    _
  %s16 = ssub.s32 1, %s14
  %s17 = scalar_select 0, %s16, %s14
  %v18 = vstv %s12
  %19 = vst [vmem:[#allocation2] sm:$0x1] %v18
  // Predicated region
  $region2: #{_lambda_.1} parent=0 // pred_check
    _
  $region3: #{_lambda_.1} parent=0 // pred_check_branch
    %21 = sbr.rel (0) target = $region5
  $region4: #{_lambda_.1} parent=0 // pred_region
    _
  $region5: #{_lambda_.1} parent=0 // pred_fallthru
    _
  // Predicated region
  $region6: #{_lambda_.1} parent=0 // pred_check
    _
  $region7: #{_lambda_.1} parent=0 // pred_check_branch
    %23 = sbr.rel (0) target = $region9
  $region8: #{_lambda_.1} parent=0 // pred_region
    _
  $region9: #{_lambda_.1} parent=0 // pred_fallthru
    _
  // Predicated region
  $region10: #{_lambda_.1} parent=0 // pred_check
    _
  $region11: #{_lambda_.1} parent=0 // pred_check_branch
    %25 = sbr.rel (0) target = $region13
  $region12: #{_lambda_.1} parent=0 // pred_region
    _
  $region13: #{_lambda_.1} parent=0 // pred_fallthru
    _
  // Predicated region
  $region14: #{_lambda_.1} parent=0 // pred_check
    _
  $region15: #{_lambda_.1} parent=0 // pred_check_branch
    %27 = sbr.rel (0) target = $region17
  $region16: #{_lambda_.1} parent=0 // pred_region
    _
  $region17: #{_lambda_.1} parent=0 // pred_fallthru
    _
  // Predicated region
  $region18: #{_lambda_.1} parent=0 // pred_check
    _
  $region19: #{_lambda_.1} parent=0 // pred_check_branch
    %29 = sbr.rel (0) target = $region21
  $region20: #{_lambda_.1} parent=0 // pred_region
    _
  $region21: #{_lambda_.1} parent=0 // pred_fallthru
    _
  // Predicated region
  $region22: #{_lambda_.1} parent=0 // pred_check
    _
  $region23: #{_lambda_.1} parent=0 // pred_check_branch
    %31 = sbr.rel (0) target = $region25
  $region24: #{_lambda_.1} parent=0 // pred_region
    _
  $region25: #{_lambda_.1} parent=0 // pred_fallthru
    _
  // Predicated region
  $region26: #{_lambda_.1} parent=0 // pred_check
    _
  $region27: #{_lambda_.1} parent=0 // pred_check_branch
    %33 = sbr.rel (0) target = $region29
  $region28: #{_lambda_.1} parent=0 // pred_region
    _
  $region29: #{_lambda_.1} parent=0 // pred_fallthru
    _
  // Predicated region
  $region30: #{_lambda_.1} parent=0 // pred_check
    _
  $region31: #{_lambda_.1} parent=0 // pred_check_branch
    %35 = sbr.rel (0) target = $region33
  $region32: #{_lambda_.1} parent=0 // pred_region
    _
  $region33: #{_lambda_.1} parent=0 // pred_fallthru
    _
  // Predicated region
  $region34: #{_lambda_.1} parent=0 // pred_check
    _
  $region35: #{_lambda_.1} parent=0 // pred_check_branch
    %37 = sbr.rel (0) target = $region37
  $region36: #{_lambda_.1} parent=0 // pred_region
    _
  $region37: #{_lambda_.1} parent=0 // pred_fallthru
    _
  // Predicated region
  $region38: #{_lambda_.1} parent=0 // pred_check
    _
  $region39: #{_lambda_.1} parent=0 // pred_check_branch
    %39 = sbr.rel (0) target = $region41
  $region40: #{_lambda_.1} parent=0 // pred_region
    _
  $region41: #{_lambda_.1} parent=0 // pred_fallthru
    _
  // Predicated region
  $region42: #{_lambda_.1} parent=0 // pred_check
    _
  $region43: #{_lambda_.1} parent=0 // pred_check_branch
    %41 = sbr.rel (0) target = $region45
  $region44: #{_lambda_.1} parent=0 // pred_region
    _
  $region45: #{_lambda_.1} parent=0 // pred_fallthru
    _
  // Predicated region
  $region46: #{_lambda_.1} parent=0 // pred_check
    _
  $region47: #{_lambda_.1} parent=0 // pred_check_branch
    %43 = sbr.rel (0) target = $region49
  $region48: #{_lambda_.1} parent=0 // pred_region
    _
  $region49: #{_lambda_.1} parent=0 // pred_fallthru
    _
  // Predicated region
  $region50: #{_lambda_.1} parent=0 // pred_check
    _
  $region51: #{_lambda_.1} parent=0 // pred_check_branch
    %45 = sbr.rel (0) target = $region53
  $region52: #{_lambda_.1} parent=0 // pred_region
    _
  $region53: #{_lambda_.1} parent=0 // pred_fallthru
    _
  %v46 = vld [vmem:[%s1] sm:$0xff]
  %v47 = vld [vmem:[%s1 + $0x8] sm:$0xff]
  %v48 = vld [vmem:[%s1 + $0x10] sm:$0xff]
  %v49 = vld [vmem:[%s1 + $0x18] sm:$0xff]
  %v50 = vld [vmem:[%s1 + $0x20] sm:$0xff]
  %v51 = vld [vmem:[%s1 + $0x28] sm:$0xff]
  %v52 = vld [vmem:[%s1 + $0x30] sm:$0xff]
  %v53 = vld [vmem:[%s1 + $0x38] sm:$0xff]
  %v54 = vld [vmem:[%s1 + $0x40] sm:$0xff]
  %v55 = vld [vmem:[%s1 + $0x48] sm:$0xff]
  %v56 = vld [vmem:[%s1 + $0x50] sm:$0xff]
  %v57 = vld [vmem:[%s1 + $0x58] sm:$0xff]
  %v58 = vld [vmem:[%s1 + $0x60] sm:$0xff]
  %v59 = vld [vmem:[%s1 + $0x68] sm:$0xff]
  %v60 = vld [vmem:[%s1 + $0x70] sm:$0xff]
  %v61 = vld [vmem:[%s1 + $0x78] sm:$0xff]
  %v62 = vld [vmem:[%s0] sm:$0xf]
  %v63 = vld [vmem:[%s2] sm:$0xff]
  %v64 = vld [vmem:[%s2 + $0x8] sm:$0xff]
  %65 = vmatprep.subr.mxu0 0.0
  %66 = vmatpush1.msra.mxu0 %v46
  %67 = vmatprep.subr.mxu0 0.0
  %68 = vmatpush1.msra.mxu0 %v47
  %69 = vmatprep.subr.mxu0 0.0
  %70 = vmatpush1.msra.mxu0 %v48
  %71 = vmatprep.subr.mxu0 0.0
  %72 = vmatpush1.msra.mxu0 %v49
  %73 = vmatprep.subr.mxu0 0.0
  %74 = vmatpush1.msra.mxu0 %v50
  %75 = vmatprep.subr.mxu0 0.0
  %76 = vmatpush1.msra.mxu0 %v51
  %77 = vmatprep.subr.mxu0 0.0
  %78 = vmatpush1.msra.mxu0 %v52
  %79 = vmatprep.subr.mxu0 0.0
  %80 = vmatpush1.msra.mxu0 %v53
  %81 = vmatprep.subr.mxu0 0.0
  %82 = vmatpush1.msra.mxu0 %v54
  %83 = vmatprep.subr.mxu0 0.0
  %84 = vmatpush1.msra.mxu0 %v55
  %85 = vmatprep.subr.mxu0 0.0
  %86 = vmatpush1.msra.mxu0 %v56
  %87 = vmatprep.subr.mxu0 0.0
  %88 = vmatpush1.msra.mxu0 %v57
  %89 = vmatprep.subr.mxu0 0.0
  %90 = vmatpush1.msra.mxu0 %v58
  %91 = vmatprep.subr.mxu0 0.0
  %92 = vmatpush1.msra.mxu0 %v59
  %93 = vmatprep.subr.mxu0 0.0
  %94 = vmatpush1.msra.mxu0 %v60
  %95 = vmatprep.subr.mxu0 0.0
  %96 = vmatpush1.msra.mxu0 %v61
  %97 = vmatprep.subr.mxu0 0.0
  %98 = vmatpush1.msra.mxu0 0.0
  %99 = vmatprep.subr.mxu0 0.0
  %100 = vmatpush1.msra.mxu0 0.0
  %101 = vmatprep.subr.mxu0 0.0
  %102 = vmatpush1.msra.mxu0 0.0
  %103 = vmatprep.subr.mxu0 0.0
  %104 = vmatpush1.msra.mxu0 0.0
  %105 = vmatprep.subr.mxu0 0.0
  %106 = vmatpush1.msra.mxu0 0.0
  %107 = vmatprep.subr.mxu0 0.0
  %108 = vmatpush1.msra.mxu0 0.0
  %109 = vmatprep.subr.mxu0 0.0
  %110 = vmatpush1.msra.mxu0 0.0
  %111 = vmatprep.subr.mxu0 0.0
  %112 = vmatpush1.msra.mxu0 0.0
  %113 = vmatprep.subr.mxu0 0.0
  %114 = vmatpush1.msra.mxu0 0.0
  %115 = vmatprep.subr.mxu0 0.0
  %116 = vmatpush1.msra.mxu0 0.0
  %117 = vmatprep.subr.mxu0 0.0
  %118 = vmatpush1.msra.mxu0 0.0
  %119 = vmatprep.subr.mxu0 0.0
  %120 = vmatpush1.msra.mxu0 0.0
  %121 = vmatprep.subr.mxu0 0.0
  %122 = vmatpush1.msra.mxu0 0.0
  %123 = vmatprep.subr.mxu0 0.0
  %124 = vmatpush1.msra.mxu0 0.0
  %125 = vmatprep.subr.mxu0 0.0
  %126 = vmatpush1.msra.mxu0 0.0
  %127 = vmatprep.subr.mxu0 0.0
  %128 = vmatpush1.msra.mxu0 0.0
  %129 = vmatprep.mubr.f32.mxu0 0.0
  %130 = vmatmul.mubr.f32.gmra.mrb[0].mxu0 %v62
  %v131 = vpop.f32.mrb[0].mxu0
  %v132 = vadd.f32 0.0, %v131
  %v133 = vpop.f32.mrb[0].mxu0
  %134 = vdwg.mxu0
  %s135 = scalar_lea.vmem %s2, 16
  %v136 = vld [vmem:[%s135] sm:$0xff]
  %v137 = vld [vmem:[%s135 + $0x8] sm:$0xff]
  %vm138 = vcmask 31744
  %v140 = vsel %vm138, %v136, 0
  %v143 = vsel %vm138, %v137, 0
  %vm145 = vcmask 1043456
  %v147 = vsel %vm145, %v132, 0
  %149 = vmatprep.subr.mxu0 0.0
  %150 = vmatpush1.msra.mxu0 %v147
  %151 = vmatprep.subr.mxu0 0.0
  %152 = vmatpush1.msra.mxu0 0.0
  %153 = vmatprep.subr.mxu0 0.0
  %154 = vmatpush1.msra.mxu0 0.0
  %155 = vmatprep.subr.mxu0 0.0
  %156 = vmatpush1.msra.mxu0 0.0
  %157 = vmatprep.subr.mxu0 0.0
  %158 = vmatpush1.msra.mxu0 0.0
  %159 = vmatprep.subr.mxu0 0.0
  %160 = vmatpush1.msra.mxu0 0.0
  %161 = vmatprep.subr.mxu0 0.0
  %162 = vmatpush1.msra.mxu0 0.0
  %163 = vmatprep.subr.mxu0 0.0
  %164 = vmatpush1.msra.mxu0 0.0
  %165 = vmatprep.subr.mxu0 0.0
  %166 = vmatpush1.msra.mxu0 0.0
  %167 = vmatprep.subr.mxu0 0.0
  %168 = vmatpush1.msra.mxu0 0.0
  %169 = vmatprep.subr.mxu0 0.0
  %170 = vmatpush1.msra.mxu0 0.0
  %171 = vmatprep.subr.mxu0 0.0
  %172 = vmatpush1.msra.mxu0 0.0
  %173 = vmatprep.subr.mxu0 0.0
  %174 = vmatpush1.msra.mxu0 0.0
  %175 = vmatprep.subr.mxu0 0.0
  %176 = vmatpush1.msra.mxu0 0.0
  %177 = vmatprep.subr.mxu0 0.0
  %178 = vmatpush1.msra.mxu0 0.0
  %179 = vmatprep.subr.mxu0 0.0
  %180 = vmatpush1.msra.mxu0 0.0
  %181 = vmatprep.subr.mxu0 0.0
  %182 = vmatpush1.msra.mxu0 0.0
  %183 = vmatprep.subr.mxu0 0.0
  %184 = vmatpush1.msra.mxu0 0.0
  %185 = vmatprep.subr.mxu0 0.0
  %186 = vmatpush1.msra.mxu0 0.0
  %187 = vmatprep.subr.mxu0 0.0
  %188 = vmatpush1.msra.mxu0 0.0
  %189 = vmatprep.subr.mxu0 0.0
  %190 = vmatpush1.msra.mxu0 0.0
  %191 = vmatprep.subr.mxu0 0.0
  %192 = vmatpush1.msra.mxu0 0.0
  %193 = vmatprep.subr.mxu0 0.0
  %194 = vmatpush1.msra.mxu0 0.0
  %195 = vmatprep.subr.mxu0 0.0
  %196 = vmatpush1.msra.mxu0 0.0
  %197 = vmatprep.subr.mxu0 0.0
  %198 = vmatpush1.msra.mxu0 0.0
  %199 = vmatprep.subr.mxu0 0.0
  %200 = vmatpush1.msra.mxu0 0.0
  %201 = vmatprep.subr.mxu0 0.0
  %202 = vmatpush1.msra.mxu0 0.0
  %203 = vmatprep.subr.mxu0 0.0
  %204 = vmatpush1.msra.mxu0 0.0
  %205 = vmatprep.subr.mxu0 0.0
  %206 = vmatpush1.msra.mxu0 0.0
  %207 = vmatprep.subr.mxu0 0.0
  %208 = vmatpush1.msra.mxu0 0.0
  %209 = vmatprep.subr.mxu0 0.0
  %210 = vmatpush1.msra.mxu0 0.0
  %211 = vmatprep.subr.mxu0 0.0
  %212 = vmatpush1.msra.mxu0 0.0
  %213 = vmatprep.mubr.f32.mxu0 0.0
  %214 = vmatmul.mubr.f32.gmra.mrb[0].mxu0 %v140
  %v215 = vpop.f32.mrb[0].mxu0
  %v216 = vadd.f32 0.0, %v215
  %v217 = vpop.f32.mrb[0].mxu0
  %218 = vmatprep.mubr.f32.mxu0 0.0
  %219 = vmatmul.mubr.f32.gmra.mrb[0].mxu0 %v143
  %v220 = vpop.f32.mrb[0].mxu0
  %v221 = vadd.f32 0.0, %v220
  %v222 = vpop.f32.mrb[0].mxu0
  %223 = vdwg.mxu0
  %v225 = vsel %vm138, %v63, 0
  %v228 = vsel %vm138, %v64, 0
  %v231 = vsel %vm145, %v62, 0
  %233 = vmatprep.subr.mxu0 0.0
  %234 = vmatpush1.msra.mxu0 %v231
  %235 = vmatprep.subr.mxu0 0.0
  %236 = vmatpush1.msra.mxu0 0.0
  %237 = vmatprep.subr.mxu0 0.0
  %238 = vmatpush1.msra.mxu0 0.0
  %239 = vmatprep.subr.mxu0 0.0
  %240 = vmatpush1.msra.mxu0 0.0
  %241 = vmatprep.subr.mxu0 0.0
  %242 = vmatpush1.msra.mxu0 0.0
  %243 = vmatprep.subr.mxu0 0.0
  %244 = vmatpush1.msra.mxu0 0.0
  %245 = vmatprep.subr.mxu0 0.0
  %246 = vmatpush1.msra.mxu0 0.0
  %247 = vmatprep.subr.mxu0 0.0
  %248 = vmatpush1.msra.mxu0 0.0
  %249 = vmatprep.subr.mxu0 0.0
  %250 = vmatpush1.msra.mxu0 0.0
  %251 = vmatprep.subr.mxu0 0.0
  %252 = vmatpush1.msra.mxu0 0.0
  %253 = vmatprep.subr.mxu0 0.0
  %254 = vmatpush1.msra.mxu0 0.0
  %255 = vmatprep.subr.mxu0 0.0
  %256 = vmatpush1.msra.mxu0 0.0
  %257 = vmatprep.subr.mxu0 0.0
  %258 = vmatpush1.msra.mxu0 0.0
  %259 = vmatprep.subr.mxu0 0.0
  %260 = vmatpush1.msra.mxu0 0.0
  %261 = vmatprep.subr.mxu0 0.0
  %262 = vmatpush1.msra.mxu0 0.0
  %263 = vmatprep.subr.mxu0 0.0
  %264 = vmatpush1.msra.mxu0 0.0
  %265 = vmatprep.subr.mxu0 0.0
  %266 = vmatpush1.msra.mxu0 0.0
  %267 = vmatprep.subr.mxu0 0.0
  %268 = vmatpush1.msra.mxu0 0.0
  %269 = vmatprep.subr.mxu0 0.0
  %270 = vmatpush1.msra.mxu0 0.0
  %271 = vmatprep.subr.mxu0 0.0
  %272 = vmatpush1.msra.mxu0 0.0
  %273 = vmatprep.subr.mxu0 0.0
  %274 = vmatpush1.msra.mxu0 0.0
  %275 = vmatprep.subr.mxu0 0.0
  %276 = vmatpush1.msra.mxu0 0.0
  %277 = vmatprep.subr.mxu0 0.0
  %278 = vmatpush1.msra.mxu0 0.0
  %279 = vmatprep.subr.mxu0 0.0
  %280 = vmatpush1.msra.mxu0 0.0
  %281 = vmatprep.subr.mxu0 0.0
  %282 = vmatpush1.msra.mxu0 0.0
  %283 = vmatprep.subr.mxu0 0.0
  %284 = vmatpush1.msra.mxu0 0.0
  %285 = vmatprep.subr.mxu0 0.0
  %286 = vmatpush1.msra.mxu0 0.0
  %287 = vmatprep.subr.mxu0 0.0
  %288 = vmatpush1.msra.mxu0 0.0
  %289 = vmatprep.subr.mxu0 0.0
  %290 = vmatpush1.msra.mxu0 0.0
  %291 = vmatprep.subr.mxu0 0.0
  %292 = vmatpush1.msra.mxu0 0.0
  %293 = vmatprep.subr.mxu0 0.0
  %294 = vmatpush1.msra.mxu0 0.0
  %295 = vmatprep.subr.mxu0 0.0
  %296 = vmatpush1.msra.mxu0 0.0
  %297 = vmatprep.mubr.f32.mxu0 0.0
  %298 = vmatmul.mubr.f32.gmra.mrb[0].mxu0 %v225
  %v299 = vpop.f32.mrb[0].mxu0
  %v300 = vadd.f32 %v216, %v299
  %v301 = vpop.f32.mrb[0].mxu0
  %302 = vmatprep.mubr.f32.mxu0 0.0
  %303 = vmatmul.mubr.f32.gmra.mrb[0].mxu0 %v228
  %v304 = vpop.f32.mrb[0].mxu0
  %v305 = vadd.f32 %v221, %v304
  %v306 = vpop.f32.mrb[0].mxu0
  %307 = vdwg.mxu0
  %308 = vmatprep.subr.mxu0 0.0
  %309 = vmatpush1.msra.mxu0 %v46
  %310 = vmatprep.subr.mxu0 0.0
  %311 = vmatpush1.msra.mxu0 %v47
  %312 = vmatprep.subr.mxu0 0.0
  %313 = vmatpush1.msra.mxu0 %v48
  %314 = vmatprep.subr.mxu0 0.0
  %315 = vmatpush1.msra.mxu0 %v49
  %316 = vmatprep.subr.mxu0 0.0
  %317 = vmatpush1.msra.mxu0 %v50
  %318 = vmatprep.subr.mxu0 0.0
  %319 = vmatpush1.msra.mxu0 %v51
  %320 = vmatprep.subr.mxu0 0.0
  %321 = vmatpush1.msra.mxu0 %v52
  %322 = vmatprep.subr.mxu0 0.0
  %323 = vmatpush1.msra.mxu0 %v53
  %324 = vmatprep.subr.mxu0 0.0
  %325 = vmatpush1.msra.mxu0 %v54
  %326 = vmatprep.subr.mxu0 0.0
  %327 = vmatpush1.msra.mxu0 %v55
  %328 = vmatprep.subr.mxu0 0.0
  %329 = vmatpush1.msra.mxu0 %v56
  %330 = vmatprep.subr.mxu0 0.0
  %331 = vmatpush1.msra.mxu0 %v57
  %332 = vmatprep.subr.mxu0 0.0
  %333 = vmatpush1.msra.mxu0 %v58
  %334 = vmatprep.subr.mxu0 0.0
  %335 = vmatpush1.msra.mxu0 %v59
  %336 = vmatprep.subr.mxu0 0.0
  %337 = vmatpush1.msra.mxu0 %v60
  %338 = vmatprep.subr.mxu0 0.0
  %339 = vmatpush1.msra.mxu0 %v61
  %340 = vmatprep.subr.mxu0 0.0
  %341 = vmatpush1.msra.mxu0 0.0
  %342 = vmatprep.subr.mxu0 0.0
  %343 = vmatpush1.msra.mxu0 0.0
  %344 = vmatprep.subr.mxu0 0.0
  %345 = vmatpush1.msra.mxu0 0.0
  %346 = vmatprep.subr.mxu0 0.0
  %347 = vmatpush1.msra.mxu0 0.0
  %348 = vmatprep.subr.mxu0 0.0
  %349 = vmatpush1.msra.mxu0 0.0
  %350 = vmatprep.subr.mxu0 0.0
  %351 = vmatpush1.msra.mxu0 0.0
  %352 = vmatprep.subr.mxu0 0.0
  %353 = vmatpush1.msra.mxu0 0.0
  %354 = vmatprep.subr.mxu0 0.0
  %355 = vmatpush1.msra.mxu0 0.0
  %356 = vmatprep.subr.mxu0 0.0
  %357 = vmatpush1.msra.mxu0 0.0
  %358 = vmatprep.subr.mxu0 0.0
  %359 = vmatpush1.msra.mxu0 0.0
  %360 = vmatprep.subr.mxu0 0.0
  %361 = vmatpush1.msra.mxu0 0.0
  %362 = vmatprep.subr.mxu0 0.0
  %363 = vmatpush1.msra.mxu0 0.0
  %364 = vmatprep.subr.mxu0 0.0
  %365 = vmatpush1.msra.mxu0 0.0
  %366 = vmatprep.subr.mxu0 0.0
  %367 = vmatpush1.msra.mxu0 0.0
  %368 = vmatprep.subr.mxu0 0.0
  %369 = vmatpush1.msra.mxu0 0.0
  %370 = vmatprep.subr.mxu0 0.0
  %371 = vmatpush1.msra.mxu0 0.0
  %372 = vmatprep.mubr.f32.mxu0 0.0
  %373 = vmatmul.mubr.f32.gmra.mrb[0].mxu0 %v132
  %v374 = vpop.f32.mrb[0].mxu0
  %v375 = vadd.f32 0.0, %v374
  %v376 = vpop.f32.mrb[0].mxu0
  %377 = vdwg.mxu0
  %s378 = scalar_lea.vmem %s2, 32
  %v379 = vld [vmem:[%s378] sm:$0xff]
  %v380 = vld [vmem:[%s378 + $0x8] sm:$0xff]
  %v382 = vsel %vm138, %v379, 0
  %v385 = vsel %vm138, %v380, 0
  %v388 = vsel %vm145, %v375, 0
  %390 = vmatprep.subr.mxu0 0.0
  %391 = vmatpush1.msra.mxu0 %v388
  %392 = vmatprep.subr.mxu0 0.0
  %393 = vmatpush1.msra.mxu0 0.0
  %394 = vmatprep.subr.mxu0 0.0
  %395 = vmatpush1.msra.mxu0 0.0
  %396 = vmatprep.subr.mxu0 0.0
  %397 = vmatpush1.msra.mxu0 0.0
  %398 = vmatprep.subr.mxu0 0.0
  %399 = vmatpush1.msra.mxu0 0.0
  %400 = vmatprep.subr.mxu0 0.0
  %401 = vmatpush1.msra.mxu0 0.0
  %402 = vmatprep.subr.mxu0 0.0
  %403 = vmatpush1.msra.mxu0 0.0
  %404 = vmatprep.subr.mxu0 0.0
  %405 = vmatpush1.msra.mxu0 0.0
  %406 = vmatprep.subr.mxu0 0.0
  %407 = vmatpush1.msra.mxu0 0.0
  %408 = vmatprep.subr.mxu0 0.0
  %409 = vmatpush1.msra.mxu0 0.0
  %410 = vmatprep.subr.mxu0 0.0
  %411 = vmatpush1.msra.mxu0 0.0
  %412 = vmatprep.subr.mxu0 0.0
  %413 = vmatpush1.msra.mxu0 0.0
  %414 = vmatprep.subr.mxu0 0.0
  %415 = vmatpush1.msra.mxu0 0.0
  %416 = vmatprep.subr.mxu0 0.0
  %417 = vmatpush1.msra.mxu0 0.0
  %418 = vmatprep.subr.mxu0 0.0
  %419 = vmatpush1.msra.mxu0 0.0
  %420 = vmatprep.subr.mxu0 0.0
  %421 = vmatpush1.msra.mxu0 0.0
  %422 = vmatprep.subr.mxu0 0.0
  %423 = vmatpush1.msra.mxu0 0.0
  %424 = vmatprep.subr.mxu0 0.0
  %425 = vmatpush1.msra.mxu0 0.0
  %426 = vmatprep.subr.mxu0 0.0
  %427 = vmatpush1.msra.mxu0 0.0
  %428 = vmatprep.subr.mxu0 0.0
  %429 = vmatpush1.msra.mxu0 0.0
  %430 = vmatprep.subr.mxu0 0.0
  %431 = vmatpush1.msra.mxu0 0.0
  %432 = vmatprep.subr.mxu0 0.0
  %433 = vmatpush1.msra.mxu0 0.0
  %434 = vmatprep.subr.mxu0 0.0
  %435 = vmatpush1.msra.mxu0 0.0
  %436 = vmatprep.subr.mxu0 0.0
  %437 = vmatpush1.msra.mxu0 0.0
  %438 = vmatprep.subr.mxu0 0.0
  %439 = vmatpush1.msra.mxu0 0.0
  %440 = vmatprep.subr.mxu0 0.0
  %441 = vmatpush1.msra.mxu0 0.0
  %442 = vmatprep.subr.mxu0 0.0
  %443 = vmatpush1.msra.mxu0 0.0
  %444 = vmatprep.subr.mxu0 0.0
  %445 = vmatpush1.msra.mxu0 0.0
  %446 = vmatprep.subr.mxu0 0.0
  %447 = vmatpush1.msra.mxu0 0.0
  %448 = vmatprep.subr.mxu0 0.0
  %449 = vmatpush1.msra.mxu0 0.0
  %450 = vmatprep.subr.mxu0 0.0
  %451 = vmatpush1.msra.mxu0 0.0
  %452 = vmatprep.subr.mxu0 0.0
  %453 = vmatpush1.msra.mxu0 0.0
  %454 = vmatprep.mubr.f32.mxu0 0.0
  %455 = vmatmul.mubr.f32.gmra.mrb[0].mxu0 %v382
  %v456 = vpop.f32.mrb[0].mxu0
  %v457 = vadd.f32 0.0, %v456
  %v458 = vpop.f32.mrb[0].mxu0
  %459 = vmatprep.mubr.f32.mxu0 0.0
  %460 = vmatmul.mubr.f32.gmra.mrb[0].mxu0 %v385
  %v461 = vpop.f32.mrb[0].mxu0
  %v462 = vadd.f32 0.0, %v461
  %v463 = vpop.f32.mrb[0].mxu0
  %464 = vdwg.mxu0
  %v465 = vadd.f32 %v300, %v457
  %v466 = vadd.f32 %v305, %v462
  %v467 = vld [vmem:[%s3] sm:$0xff]
  %v468 = vld [vmem:[%s3 + $0x8] sm:$0xff]
  %470 = vset.pattern.permute.xlu0 0
  %471 = vperm.xlu0 %470, %v467
  %v472 = vpop.permute.xlu0 %471
  %475 = vset.pattern.permute.xlu0 0
  %476 = vperm.xlu0 %475, %v468
  %v477 = vpop.permute.xlu0 %476
  %v479 = vadd.f32 %v465, %v472
  %v480 = vadd.f32 %v466, %v477
  %v481 = vmax.f32 %v479, 0.0
  %v482 = vmax.f32 %v480, 0.0
  %v483 = vld [vmem:[%s4] sm:$0xff]
  %v484 = vld [vmem:[%s4 + $0x8] sm:$0xff]
  %v485 = vld [vmem:[%s4 + $0x10] sm:$0xff]
  %v486 = vld [vmem:[%s4 + $0x18] sm:$0xff]
  %487 = vmatprep.subr.mxu0 0.0
  %488 = vmatpush1.msra.mxu0 %v46
  %489 = vmatprep.subr.mxu0 0.0
  %490 = vmatpush1.msra.mxu0 %v47
  %491 = vmatprep.subr.mxu0 0.0
  %492 = vmatpush1.msra.mxu0 %v48
  %493 = vmatprep.subr.mxu0 0.0
  %494 = vmatpush1.msra.mxu0 %v49
  %495 = vmatprep.subr.mxu0 0.0
  %496 = vmatpush1.msra.mxu0 %v50
  %497 = vmatprep.subr.mxu0 0.0
  %498 = vmatpush1.msra.mxu0 %v51
  %499 = vmatprep.subr.mxu0 0.0
  %500 = vmatpush1.msra.mxu0 %v52
  %501 = vmatprep.subr.mxu0 0.0
  %502 = vmatpush1.msra.mxu0 %v53
  %503 = vmatprep.subr.mxu0 0.0
  %504 = vmatpush1.msra.mxu0 %v54
  %505 = vmatprep.subr.mxu0 0.0
  %506 = vmatpush1.msra.mxu0 %v55
  %507 = vmatprep.subr.mxu0 0.0
  %508 = vmatpush1.msra.mxu0 %v56
  %509 = vmatprep.subr.mxu0 0.0
  %510 = vmatpush1.msra.mxu0 %v57
  %511 = vmatprep.subr.mxu0 0.0
  %512 = vmatpush1.msra.mxu0 %v58
  %513 = vmatprep.subr.mxu0 0.0
  %514 = vmatpush1.msra.mxu0 %v59
  %515 = vmatprep.subr.mxu0 0.0
  %516 = vmatpush1.msra.mxu0 %v60
  %517 = vmatprep.subr.mxu0 0.0
  %518 = vmatpush1.msra.mxu0 %v61
  %519 = vmatprep.subr.mxu0 0.0
  %520 = vmatpush1.msra.mxu0 0.0
  %521 = vmatprep.subr.mxu0 0.0
  %522 = vmatpush1.msra.mxu0 0.0
  %523 = vmatprep.subr.mxu0 0.0
  %524 = vmatpush1.msra.mxu0 0.0
  %525 = vmatprep.subr.mxu0 0.0
  %526 = vmatpush1.msra.mxu0 0.0
  %527 = vmatprep.subr.mxu0 0.0
  %528 = vmatpush1.msra.mxu0 0.0
  %529 = vmatprep.subr.mxu0 0.0
  %530 = vmatpush1.msra.mxu0 0.0
  %531 = vmatprep.subr.mxu0 0.0
  %532 = vmatpush1.msra.mxu0 0.0
  %533 = vmatprep.subr.mxu0 0.0
  %534 = vmatpush1.msra.mxu0 0.0
  %535 = vmatprep.subr.mxu0 0.0
  %536 = vmatpush1.msra.mxu0 0.0
  %537 = vmatprep.subr.mxu0 0.0
  %538 = vmatpush1.msra.mxu0 0.0
  %539 = vmatprep.subr.mxu0 0.0
  %540 = vmatpush1.msra.mxu0 0.0
  %541 = vmatprep.subr.mxu0 0.0
  %542 = vmatpush1.msra.mxu0 0.0
  %543 = vmatprep.subr.mxu0 0.0
  %544 = vmatpush1.msra.mxu0 0.0
  %545 = vmatprep.subr.mxu0 0.0
  %546 = vmatpush1.msra.mxu0 0.0
  %547 = vmatprep.subr.mxu0 0.0
  %548 = vmatpush1.msra.mxu0 0.0
  %549 = vmatprep.subr.mxu0 0.0
  %550 = vmatpush1.msra.mxu0 0.0
  %551 = vmatprep.mubr.f32.mxu0 0.0
  %552 = vmatmul.mubr.f32.gmra.mrb[0].mxu0 %v481
  %v553 = vpop.f32.mrb[0].mxu0
  %v554 = vadd.f32 0.0, %v553
  %v555 = vpop.f32.mrb[0].mxu0
  %556 = vmatprep.mubr.f32.mxu0 0.0
  %557 = vmatmul.mubr.f32.gmra.mrb[0].mxu0 %v482
  %v558 = vpop.f32.mrb[0].mxu0
  %v559 = vadd.f32 0.0, %v558
  %v560 = vpop.f32.mrb[0].mxu0
  %561 = vdwg.mxu0
  %s562 = scalar_lea.vmem %s4, 32
  %v563 = vld [vmem:[%s562] sm:$0xff]
  %v564 = vld [vmem:[%s562 + $0x8] sm:$0xff]
  %v565 = vld [vmem:[%s562 + $0x10] sm:$0xff]
  %v566 = vld [vmem:[%s562 + $0x18] sm:$0xff]
  %vm567 = vcmask 130048
  %v569 = vsel %vm567, %v563, 0
  %v572 = vsel %vm567, %v564, 0
  %v575 = vsel %vm567, %v565, 0
  %v578 = vsel %vm567, %v566, 0
  %580 = vmatprep.subr.mxu0 0.0
  %581 = vmatpush1.msra.mxu0 %v554
  %582 = vmatprep.subr.mxu0 0.0
  %583 = vmatpush1.msra.mxu0 %v559
  %584 = vmatprep.subr.mxu0 0.0
  %585 = vmatpush1.msra.mxu0 0.0
  %586 = vmatprep.subr.mxu0 0.0
  %587 = vmatpush1.msra.mxu0 0.0
  %588 = vmatprep.subr.mxu0 0.0
  %589 = vmatpush1.msra.mxu0 0.0
  %590 = vmatprep.subr.mxu0 0.0
  %591 = vmatpush1.msra.mxu0 0.0
  %592 = vmatprep.subr.mxu0 0.0
  %593 = vmatpush1.msra.mxu0 0.0
  %594 = vmatprep.subr.mxu0 0.0
  %595 = vmatpush1.msra.mxu0 0.0
  %596 = vmatprep.subr.mxu0 0.0
  %597 = vmatpush1.msra.mxu0 0.0
  %598 = vmatprep.subr.mxu0 0.0
  %599 = vmatpush1.msra.mxu0 0.0
  %600 = vmatprep.subr.mxu0 0.0
  %601 = vmatpush1.msra.mxu0 0.0
  %602 = vmatprep.subr.mxu0 0.0
  %603 = vmatpush1.msra.mxu0 0.0
  %604 = vmatprep.subr.mxu0 0.0
  %605 = vmatpush1.msra.mxu0 0.0
  %606 = vmatprep.subr.mxu0 0.0
  %607 = vmatpush1.msra.mxu0 0.0
  %608 = vmatprep.subr.mxu0 0.0
  %609 = vmatpush1.msra.mxu0 0.0
  %610 = vmatprep.subr.mxu0 0.0
  %611 = vmatpush1.msra.mxu0 0.0
  %612 = vmatprep.subr.mxu0 0.0
  %613 = vmatpush1.msra.mxu0 0.0
  %614 = vmatprep.subr.mxu0 0.0
  %615 = vmatpush1.msra.mxu0 0.0
  %616 = vmatprep.subr.mxu0 0.0
  %617 = vmatpush1.msra.mxu0 0.0
  %618 = vmatprep.subr.mxu0 0.0
  %619 = vmatpush1.msra.mxu0 0.0
  %620 = vmatprep.subr.mxu0 0.0
  %621 = vmatpush1.msra.mxu0 0.0
  %622 = vmatprep.subr.mxu0 0.0
  %623 = vmatpush1.msra.mxu0 0.0
  %624 = vmatprep.subr.mxu0 0.0
  %625 = vmatpush1.msra.mxu0 0.0
  %626 = vmatprep.subr.mxu0 0.0
  %627 = vmatpush1.msra.mxu0 0.0
  %628 = vmatprep.subr.mxu0 0.0
  %629 = vmatpush1.msra.mxu0 0.0
  %630 = vmatprep.subr.mxu0 0.0
  %631 = vmatpush1.msra.mxu0 0.0
  %632 = vmatprep.subr.mxu0 0.0
  %633 = vmatpush1.msra.mxu0 0.0
  %634 = vmatprep.subr.mxu0 0.0
  %635 = vmatpush1.msra.mxu0 0.0
  %636 = vmatprep.subr.mxu0 0.0
  %637 = vmatpush1.msra.mxu0 0.0
  %638 = vmatprep.subr.mxu0 0.0
  %639 = vmatpush1.msra.mxu0 0.0
  %640 = vmatprep.subr.mxu0 0.0
  %641 = vmatpush1.msra.mxu0 0.0
  %642 = vmatprep.subr.mxu0 0.0
  %643 = vmatpush1.msra.mxu0 0.0
  %644 = vmatprep.mubr.f32.mxu0 0.0
  %645 = vmatmul.mubr.f32.gmra.mrb[0].mxu0 %v569
  %v646 = vpop.f32.mrb[0].mxu0
  %v647 = vadd.f32 0.0, %v646
  %v648 = vpop.f32.mrb[0].mxu0
  %649 = vmatprep.mubr.f32.mxu0 0.0
  %650 = vmatmul.mubr.f32.gmra.mrb[0].mxu0 %v572
  %v651 = vpop.f32.mrb[0].mxu0
  %v652 = vadd.f32 0.0, %v651
  %v653 = vpop.f32.mrb[0].mxu0
  %654 = vmatprep.mubr.f32.mxu0 0.0
  %655 = vmatmul.mubr.f32.gmra.mrb[0].mxu0 %v575
  %v656 = vpop.f32.mrb[0].mxu0
  %v657 = vadd.f32 0.0, %v656
  %v658 = vpop.f32.mrb[0].mxu0
  %659 = vmatprep.mubr.f32.mxu0 0.0
  %660 = vmatmul.mubr.f32.gmra.mrb[0].mxu0 %v578
  %v661 = vpop.f32.mrb[0].mxu0
  %v662 = vadd.f32 0.0, %v661
  %v663 = vpop.f32.mrb[0].mxu0
  %664 = vdwg.mxu0
  %v666 = vsel %vm567, %v483, 0
  %v669 = vsel %vm567, %v484, 0
  %v672 = vsel %vm567, %v485, 0
  %v675 = vsel %vm567, %v486, 0
  %677 = vmatprep.subr.mxu0 0.0
  %678 = vmatpush1.msra.mxu0 %v481
  %679 = vmatprep.subr.mxu0 0.0
  %680 = vmatpush1.msra.mxu0 %v482
  %681 = vmatprep.subr.mxu0 0.0
  %682 = vmatpush1.msra.mxu0 0.0
  %683 = vmatprep.subr.mxu0 0.0
  %684 = vmatpush1.msra.mxu0 0.0
  %685 = vmatprep.subr.mxu0 0.0
  %686 = vmatpush1.msra.mxu0 0.0
  %687 = vmatprep.subr.mxu0 0.0
  %688 = vmatpush1.msra.mxu0 0.0
  %689 = vmatprep.subr.mxu0 0.0
  %690 = vmatpush1.msra.mxu0 0.0
  %691 = vmatprep.subr.mxu0 0.0
  %692 = vmatpush1.msra.mxu0 0.0
  %693 = vmatprep.subr.mxu0 0.0
  %694 = vmatpush1.msra.mxu0 0.0
  %695 = vmatprep.subr.mxu0 0.0
  %696 = vmatpush1.msra.mxu0 0.0
  %697 = vmatprep.subr.mxu0 0.0
  %698 = vmatpush1.msra.mxu0 0.0
  %699 = vmatprep.subr.mxu0 0.0
  %700 = vmatpush1.msra.mxu0 0.0
  %701 = vmatprep.subr.mxu0 0.0
  %702 = vmatpush1.msra.mxu0 0.0
  %703 = vmatprep.subr.mxu0 0.0
  %704 = vmatpush1.msra.mxu0 0.0
  %705 = vmatprep.subr.mxu0 0.0
  %706 = vmatpush1.msra.mxu0 0.0
  %707 = vmatprep.subr.mxu0 0.0
  %708 = vmatpush1.msra.mxu0 0.0
  %709 = vmatprep.subr.mxu0 0.0
  %710 = vmatpush1.msra.mxu0 0.0
  %711 = vmatprep.subr.mxu0 0.0
  %712 = vmatpush1.msra.mxu0 0.0
  %713 = vmatprep.subr.mxu0 0.0
  %714 = vmatpush1.msra.mxu0 0.0
  %715 = vmatprep.subr.mxu0 0.0
  %716 = vmatpush1.msra.mxu0 0.0
  %717 = vmatprep.subr.mxu0 0.0
  %718 = vmatpush1.msra.mxu0 0.0
  %719 = vmatprep.subr.mxu0 0.0
  %720 = vmatpush1.msra.mxu0 0.0
  %721 = vmatprep.subr.mxu0 0.0
  %722 = vmatpush1.msra.mxu0 0.0
  %723 = vmatprep.subr.mxu0 0.0
  %724 = vmatpush1.msra.mxu0 0.0
  %725 = vmatprep.subr.mxu0 0.0
  %726 = vmatpush1.msra.mxu0 0.0
  %727 = vmatprep.subr.mxu0 0.0
  %728 = vmatpush1.msra.mxu0 0.0
  %729 = vmatprep.subr.mxu0 0.0
  %730 = vmatpush1.msra.mxu0 0.0
  %731 = vmatprep.subr.mxu0 0.0
  %732 = vmatpush1.msra.mxu0 0.0
  %733 = vmatprep.subr.mxu0 0.0
  %734 = vmatpush1.msra.mxu0 0.0
  %735 = vmatprep.subr.mxu0 0.0
  %736 = vmatpush1.msra.mxu0 0.0
  %737 = vmatprep.subr.mxu0 0.0
  %738 = vmatpush1.msra.mxu0 0.0
  %739 = vmatprep.subr.mxu0 0.0
  %740 = vmatpush1.msra.mxu0 0.0
  %741 = vmatprep.mubr.f32.mxu0 0.0
  %742 = vmatmul.mubr.f32.gmra.mrb[0].mxu0 %v666
  %v743 = vpop.f32.mrb[0].mxu0
  %v744 = vadd.f32 %v647, %v743
  %v745 = vpop.f32.mrb[0].mxu0
  %746 = vmatprep.mubr.f32.mxu0 0.0
  %747 = vmatmul.mubr.f32.gmra.mrb[0].mxu0 %v669
  %v748 = vpop.f32.mrb[0].mxu0
  %v749 = vadd.f32 %v652, %v748
  %v750 = vpop.f32.mrb[0].mxu0
  %751 = vmatprep.mubr.f32.mxu0 0.0
  %752 = vmatmul.mubr.f32.gmra.mrb[0].mxu0 %v672
  %v753 = vpop.f32.mrb[0].mxu0
  %v754 = vadd.f32 %v657, %v753
  %v755 = vpop.f32.mrb[0].mxu0
  %756 = vmatprep.mubr.f32.mxu0 0.0
  %757 = vmatmul.mubr.f32.gmra.mrb[0].mxu0 %v675
  %v758 = vpop.f32.mrb[0].mxu0
  %v759 = vadd.f32 %v662, %v758
  %v760 = vpop.f32.mrb[0].mxu0
  %761 = vdwg.mxu0
  %v762 = vld [vmem:[%s5] sm:$0xff]
  %v763 = vld [vmem:[%s5 + $0x8] sm:$0xff]
  %v764 = vld [vmem:[%s5 + $0x10] sm:$0xff]
  %v765 = vld [vmem:[%s5 + $0x18] sm:$0xff]
  %767 = vset.pattern.permute.xlu0 0
  %768 = vperm.xlu0 %767, %v762
  %v769 = vpop.permute.xlu0 %768
  %772 = vset.pattern.permute.xlu0 0
  %773 = vperm.xlu0 %772, %v763
  %v774 = vpop.permute.xlu0 %773
  %777 = vset.pattern.permute.xlu0 0
  %778 = vperm.xlu0 %777, %v764
  %v779 = vpop.permute.xlu0 %778
  %782 = vset.pattern.permute.xlu0 0
  %783 = vperm.xlu0 %782, %v765
  %v784 = vpop.permute.xlu0 %783
  %v786 = vadd.f32 %v744, %v769
  %v787 = vadd.f32 %v749, %v774
  %v788 = vadd.f32 %v754, %v779
  %v789 = vadd.f32 %v759, %v784
  %v790 = vmax.f32 %v786, 0.0
  %v791 = vmax.f32 %v787, 0.0
  %v792 = vmax.f32 %v788, 0.0
  %v793 = vmax.f32 %v789, 0.0
  %794 = vxpose.xlu0.b32.start [1/16] %v790, 128
  %795 = vxpose.xlu0.b32.cont [2/16] %v791, 128
  %796 = vxpose.xlu0.b32.cont [3/16] %v792, 128
  %797 = vxpose.xlu0.b32.cont [4/16] %v793, 128
  %798 = vxpose.xlu0.b32.cont [5/16] 0.0, 128
  %799 = vxpose.xlu0.b32.cont [6/16] 0.0, 128
  %800 = vxpose.xlu0.b32.cont [7/16] 0.0, 128
  %801 = vxpose.xlu0.b32.cont [8/16] 0.0, 128
  %802 = vxpose.xlu0.b32.cont [9/16] 0.0, 128
  %803 = vxpose.xlu0.b32.cont [10/16] 0.0, 128
  %804 = vxpose.xlu0.b32.cont [11/16] 0.0, 128
  %805 = vxpose.xlu0.b32.cont [12/16] 0.0, 128
  %806 = vxpose.xlu0.b32.cont [13/16] 0.0, 128
  %807 = vxpose.xlu0.b32.cont [14/16] 0.0, 128
  %808 = vxpose.xlu0.b32.cont [15/16] 0.0, 128
  %809 = vxpose.xlu0.b32.end [16/16] 0.0, 128
  %v810 = vpop.trf.xlu0
  %v811 = vpop.trf.xlu0
  %v812 = vpop.trf.xlu0
  %v813 = vpop.trf.xlu0
  %v814 = vpop.trf.xlu0
  %v815 = vpop.trf.xlu0
  %v816 = vpop.trf.xlu0
  %v817 = vpop.trf.xlu0
  %v818 = vpop.trf.xlu0
  %v819 = vpop.trf.xlu0
  %v820 = vpop.trf.xlu0
  %v821 = vpop.trf.xlu0
  %v822 = vpop.trf.xlu0
  %v823 = vpop.trf.xlu0
  %v824 = vpop.trf.xlu0
  %v825 = vpop.trf.xlu0
  %v826 = vld [vmem:[%s6] sm:$0xff]
  %v827 = vld [vmem:[%s6 + $0x8] sm:$0xff]
  %v828 = vld [vmem:[%s6 + $0x10] sm:$0xff]
  %v829 = vld [vmem:[%s6 + $0x18] sm:$0xff]
  %v830 = vld [vmem:[%s7] sm:$0x1]
  %v832 = vlaneseq
  %v833 = vshrl.u32 %v832, 7
  %v834 = vsub.s32 0, %v833
  %v835 = vrot.slane %v830, %v834
  %vm837 = vcmask 261120
  %v839 = vsel %vm837, %v810, 0
  %v842 = vsel %vm837, %v811, 0
  %v845 = vsel %vm837, %v812, 0
  %v848 = vsel %vm837, %v813, 0
  %v851 = vsel %vm837, %v814, 0
  %v854 = vsel %vm837, %v815, 0
  %v857 = vsel %vm837, %v816, 0
  %v860 = vsel %vm837, %v817, 0
  %v863 = vsel %vm837, %v818, 0
  %v866 = vsel %vm837, %v819, 0
  %v869 = vsel %vm837, %v820, 0
  %v872 = vsel %vm837, %v821, 0
  %v875 = vsel %vm837, %v822, 0
  %v878 = vsel %vm837, %v823, 0
  %v881 = vsel %vm837, %v824, 0
  %v884 = vsel %vm837, %v825, 0
  %886 = vmatprep.subr.mxu0 0.0
  %887 = vmatpush1.msra.mxu0 %v826
  %888 = vmatprep.subr.mxu0 0.0
  %889 = vmatpush1.msra.mxu0 %v827
  %890 = vmatprep.subr.mxu0 0.0
  %891 = vmatpush1.msra.mxu0 %v828
  %892 = vmatprep.subr.mxu0 0.0
  %893 = vmatpush1.msra.mxu0 %v829
  %894 = vmatprep.subr.mxu0 0.0
  %895 = vmatpush1.msra.mxu0 0.0
  %896 = vmatprep.subr.mxu0 0.0
  %897 = vmatpush1.msra.mxu0 0.0
  %898 = vmatprep.subr.mxu0 0.0
  %899 = vmatpush1.msra.mxu0 0.0
  %900 = vmatprep.subr.mxu0 0.0
  %901 = vmatpush1.msra.mxu0 0.0
  %902 = vmatprep.subr.mxu0 0.0
  %903 = vmatpush1.msra.mxu0 0.0
  %904 = vmatprep.subr.mxu0 0.0
  %905 = vmatpush1.msra.mxu0 0.0
  %906 = vmatprep.subr.mxu0 0.0
  %907 = vmatpush1.msra.mxu0 0.0
  %908 = vmatprep.subr.mxu0 0.0
  %909 = vmatpush1.msra.mxu0 0.0
  %910 = vmatprep.subr.mxu0 0.0
  %911 = vmatpush1.msra.mxu0 0.0
  %912 = vmatprep.subr.mxu0 0.0
  %913 = vmatpush1.msra.mxu0 0.0
  %914 = vmatprep.subr.mxu0 0.0
  %915 = vmatpush1.msra.mxu0 0.0
  %916 = vmatprep.subr.mxu0 0.0
  %917 = vmatpush1.msra.mxu0 0.0
  %918 = vmatprep.subr.mxu0 0.0
  %919 = vmatpush1.msra.mxu0 0.0
  %920 = vmatprep.subr.mxu0 0.0
  %921 = vmatpush1.msra.mxu0 0.0
  %922 = vmatprep.subr.mxu0 0.0
  %923 = vmatpush1.msra.mxu0 0.0
  %924 = vmatprep.subr.mxu0 0.0
  %925 = vmatpush1.msra.mxu0 0.0
  %926 = vmatprep.subr.mxu0 0.0
  %927 = vmatpush1.msra.mxu0 0.0
  %928 = vmatprep.subr.mxu0 0.0
  %929 = vmatpush1.msra.mxu0 0.0
  %930 = vmatprep.subr.mxu0 0.0
  %931 = vmatpush1.msra.mxu0 0.0
  %932 = vmatprep.subr.mxu0 0.0
  %933 = vmatpush1.msra.mxu0 0.0
  %934 = vmatprep.subr.mxu0 0.0
  %935 = vmatpush1.msra.mxu0 0.0
  %936 = vmatprep.subr.mxu0 0.0
  %937 = vmatpush1.msra.mxu0 0.0
  %938 = vmatprep.subr.mxu0 0.0
  %939 = vmatpush1.msra.mxu0 0.0
  %940 = vmatprep.subr.mxu0 0.0
  %941 = vmatpush1.msra.mxu0 0.0
  %942 = vmatprep.subr.mxu0 0.0
  %943 = vmatpush1.msra.mxu0 0.0
  %944 = vmatprep.subr.mxu0 0.0
  %945 = vmatpush1.msra.mxu0 0.0
  %946 = vmatprep.subr.mxu0 0.0
  %947 = vmatpush1.msra.mxu0 0.0
  %948 = vmatprep.subr.mxu0 0.0
  %949 = vmatpush1.msra.mxu0 0.0
  %950 = vmatprep.mubr.f32.mxu0 0.0
  %951 = vmatmul.mubr.f32.gmra.mrb[0].mxu0 %v839
  %v952 = vpop.f32.mrb[0].mxu0
  %v953 = vadd.f32 %v835, %v952
  %v954 = vpop.f32.mrb[0].mxu0
  %955 = vmatprep.mubr.f32.mxu0 0.0
  %956 = vmatmul.mubr.f32.gmra.mrb[0].mxu0 %v842
  %v957 = vpop.f32.mrb[0].mxu0
  %v958 = vadd.f32 %v835, %v957
  %v959 = vpop.f32.mrb[0].mxu0
  %960 = vmatprep.mubr.f32.mxu0 0.0
  %961 = vmatmul.mubr.f32.gmra.mrb[0].mxu0 %v845
  %v962 = vpop.f32.mrb[0].mxu0
  %v963 = vadd.f32 %v835, %v962
  %v964 = vpop.f32.mrb[0].mxu0
  %965 = vmatprep.mubr.f32.mxu0 0.0
  %966 = vmatmul.mubr.f32.gmra.mrb[0].mxu0 %v848
  %v967 = vpop.f32.mrb[0].mxu0
  %v968 = vadd.f32 %v835, %v967
  %v969 = vpop.f32.mrb[0].mxu0
  %970 = vmatprep.mubr.f32.mxu0 0.0
  %971 = vmatmul.mubr.f32.gmra.mrb[0].mxu0 %v851
  %v972 = vpop.f32.mrb[0].mxu0
  %v973 = vadd.f32 %v835, %v972
  %v974 = vpop.f32.mrb[0].mxu0
  %975 = vmatprep.mubr.f32.mxu0 0.0
  %976 = vmatmul.mubr.f32.gmra.mrb[0].mxu0 %v854
  %v977 = vpop.f32.mrb[0].mxu0
  %v978 = vadd.f32 %v835, %v977
  %v979 = vpop.f32.mrb[0].mxu0
  %980 = vmatprep.mubr.f32.mxu0 0.0
  %981 = vmatmul.mubr.f32.gmra.mrb[0].mxu0 %v857
  %v982 = vpop.f32.mrb[0].mxu0
  %v983 = vadd.f32 %v835, %v982
  %v984 = vpop.f32.mrb[0].mxu0
  %985 = vmatprep.mubr.f32.mxu0 0.0
  %986 = vmatmul.mubr.f32.gmra.mrb[0].mxu0 %v860
  %v987 = vpop.f32.mrb[0].mxu0
  %v988 = vadd.f32 %v835, %v987
  %v989 = vpop.f32.mrb[0].mxu0
  %990 = vmatprep.mubr.f32.mxu0 0.0
  %991 = vmatmul.mubr.f32.gmra.mrb[0].mxu0 %v863
  %v992 = vpop.f32.mrb[0].mxu0
  %v993 = vadd.f32 %v835, %v992
  %v994 = vpop.f32.mrb[0].mxu0
  %995 = vmatprep.mubr.f32.mxu0 0.0
  %996 = vmatmul.mubr.f32.gmra.mrb[0].mxu0 %v866
  %v997 = vpop.f32.mrb[0].mxu0
  %v998 = vadd.f32 %v835, %v997
  %v999 = vpop.f32.mrb[0].mxu0
  %1000 = vmatprep.mubr.f32.mxu0 0.0
  %1001 = vmatmul.mubr.f32.gmra.mrb[0].mxu0 %v869
  %v1002 = vpop.f32.mrb[0].mxu0
  %v1003 = vadd.f32 %v835, %v1002
  %v1004 = vpop.f32.mrb[0].mxu0
  %1005 = vmatprep.mubr.f32.mxu0 0.0
  %1006 = vmatmul.mubr.f32.gmra.mrb[0].mxu0 %v872
  %v1007 = vpop.f32.mrb[0].mxu0
  %v1008 = vadd.f32 %v835, %v1007
  %v1009 = vpop.f32.mrb[0].mxu0
  %1010 = vmatprep.mubr.f32.mxu0 0.0
  %1011 = vmatmul.mubr.f32.gmra.mrb[0].mxu0 %v875
  %v1012 = vpop.f32.mrb[0].mxu0
  %v1013 = vadd.f32 %v835, %v1012
  %v1014 = vpop.f32.mrb[0].mxu0
  %1015 = vmatprep.mubr.f32.mxu0 0.0
  %1016 = vmatmul.mubr.f32.gmra.mrb[0].mxu0 %v878
  %v1017 = vpop.f32.mrb[0].mxu0
  %v1018 = vadd.f32 %v835, %v1017
  %v1019 = vpop.f32.mrb[0].mxu0
  %1020 = vmatprep.mubr.f32.mxu0 0.0
  %1021 = vmatmul.mubr.f32.gmra.mrb[0].mxu0 %v881
  %v1022 = vpop.f32.mrb[0].mxu0
  %v1023 = vadd.f32 %v835, %v1022
  %v1024 = vpop.f32.mrb[0].mxu0
  %1025 = vmatprep.mubr.f32.mxu0 0.0
  %1026 = vmatmul.mubr.f32.gmra.mrb[0].mxu0 %v884
  %v1027 = vpop.f32.mrb[0].mxu0
  %v1028 = vadd.f32 %v835, %v1027
  %v1029 = vpop.f32.mrb[0].mxu0
  %1030 = vdwg.mxu0
  %vm1031 = vcmp.ge.f32.partialorder %v953, 0.0
  %vm1032 = vcmp.ge.f32.partialorder %v958, 0.0
  %vm1033 = vcmp.ge.f32.partialorder %v963, 0.0
  %vm1034 = vcmp.ge.f32.partialorder %v968, 0.0
  %vm1035 = vcmp.ge.f32.partialorder %v973, 0.0
  %vm1036 = vcmp.ge.f32.partialorder %v978, 0.0
  %vm1037 = vcmp.ge.f32.partialorder %v983, 0.0
  %vm1038 = vcmp.ge.f32.partialorder %v988, 0.0
  %vm1039 = vcmp.ge.f32.partialorder %v993, 0.0
  %vm1040 = vcmp.ge.f32.partialorder %v998, 0.0
  %vm1041 = vcmp.ge.f32.partialorder %v1003, 0.0
  %vm1042 = vcmp.ge.f32.partialorder %v1008, 0.0
  %vm1043 = vcmp.ge.f32.partialorder %v1013, 0.0
  %vm1044 = vcmp.ge.f32.partialorder %v1018, 0.0
  %vm1045 = vcmp.ge.f32.partialorder %v1023, 0.0
  %vm1046 = vcmp.ge.f32.partialorder %v1028, 0.0
  %v1047 = vmul.f32 %v953, 0.1
  %v1048 = vmul.f32 %v958, 0.1
  %v1049 = vmul.f32 %v963, 0.1
  %v1050 = vmul.f32 %v968, 0.1
  %v1051 = vmul.f32 %v973, 0.1
  %v1052 = vmul.f32 %v978, 0.1
  %v1053 = vmul.f32 %v983, 0.1
  %v1054 = vmul.f32 %v988, 0.1
  %v1055 = vmul.f32 %v993, 0.1
  %v1056 = vmul.f32 %v998, 0.1
  %v1057 = vmul.f32 %v1003, 0.1
  %v1058 = vmul.f32 %v1008, 0.1
  %v1059 = vmul.f32 %v1013, 0.1
  %v1060 = vmul.f32 %v1018, 0.1
  %v1061 = vmul.f32 %v1023, 0.1
  %v1062 = vmul.f32 %v1028, 0.1
  %v1063 = vsel %vm1031, %v953, %v1047
  %v1064 = vsel %vm1032, %v958, %v1048
  %v1065 = vsel %vm1033, %v963, %v1049
  %v1066 = vsel %vm1034, %v968, %v1050
  %v1067 = vsel %vm1035, %v973, %v1051
  %v1068 = vsel %vm1036, %v978, %v1052
  %v1069 = vsel %vm1037, %v983, %v1053
  %v1070 = vsel %vm1038, %v988, %v1054
  %v1071 = vsel %vm1039, %v993, %v1055
  %v1072 = vsel %vm1040, %v998, %v1056
  %v1073 = vsel %vm1041, %v1003, %v1057
  %v1074 = vsel %vm1042, %v1008, %v1058
  %v1075 = vsel %vm1043, %v1013, %v1059
  %v1076 = vsel %vm1044, %v1018, %v1060
  %v1077 = vsel %vm1045, %v1023, %v1061
  %v1078 = vsel %vm1046, %v1028, %v1062
  %v1079 = vld [vmem:[%s8] sm:$0xff]
  %v1080 = vld [vmem:[%s8 + $0x8] sm:$0xff]
  %v1081 = vld [vmem:[%s8 + $0x10] sm:$0xff]
  %v1082 = vld [vmem:[%s8 + $0x18] sm:$0xff]
  %v1083 = vld [vmem:[%s10] sm:$0x1]
  %v1085 = vlaneseq
  %v1086 = vshrl.u32 %v1085, 7
  %v1087 = vsub.s32 0, %v1086
  %v1088 = vrot.slane %v1083, %v1087
  %v1091 = vsel %vm837, %v1063, 0
  %v1094 = vsel %vm837, %v1064, 0
  %v1097 = vsel %vm837, %v1065, 0
  %v1100 = vsel %vm837, %v1066, 0
  %v1103 = vsel %vm837, %v1067, 0
  %v1106 = vsel %vm837, %v1068, 0
  %v1109 = vsel %vm837, %v1069, 0
  %v1112 = vsel %vm837, %v1070, 0
  %v1115 = vsel %vm837, %v1071, 0
  %v1118 = vsel %vm837, %v1072, 0
  %v1121 = vsel %vm837, %v1073, 0
  %v1124 = vsel %vm837, %v1074, 0
  %v1127 = vsel %vm837, %v1075, 0
  %v1130 = vsel %vm837, %v1076, 0
  %v1133 = vsel %vm837, %v1077, 0
  %v1136 = vsel %vm837, %v1078, 0
  %1138 = vmatprep.subr.mxu0 0.0
  %1139 = vmatpush1.msra.mxu0 %v1079
  %1140 = vmatprep.subr.mxu0 0.0
  %1141 = vmatpush1.msra.mxu0 %v1080
  %1142 = vmatprep.subr.mxu0 0.0
  %1143 = vmatpush1.msra.mxu0 %v1081
  %1144 = vmatprep.subr.mxu0 0.0
  %1145 = vmatpush1.msra.mxu0 %v1082
  %1146 = vmatprep.subr.mxu0 0.0
  %1147 = vmatpush1.msra.mxu0 0.0
  %1148 = vmatprep.subr.mxu0 0.0
  %1149 = vmatpush1.msra.mxu0 0.0
  %1150 = vmatprep.subr.mxu0 0.0
  %1151 = vmatpush1.msra.mxu0 0.0
  %1152 = vmatprep.subr.mxu0 0.0
  %1153 = vmatpush1.msra.mxu0 0.0
  %1154 = vmatprep.subr.mxu0 0.0
  %1155 = vmatpush1.msra.mxu0 0.0
  %1156 = vmatprep.subr.mxu0 0.0
  %1157 = vmatpush1.msra.mxu0 0.0
  %1158 = vmatprep.subr.mxu0 0.0
  %1159 = vmatpush1.msra.mxu0 0.0
  %1160 = vmatprep.subr.mxu0 0.0
  %1161 = vmatpush1.msra.mxu0 0.0
  %1162 = vmatprep.subr.mxu0 0.0
  %1163 = vmatpush1.msra.mxu0 0.0
  %1164 = vmatprep.subr.mxu0 0.0
  %1165 = vmatpush1.msra.mxu0 0.0
  %1166 = vmatprep.subr.mxu0 0.0
  %1167 = vmatpush1.msra.mxu0 0.0
  %1168 = vmatprep.subr.mxu0 0.0
  %1169 = vmatpush1.msra.mxu0 0.0
  %1170 = vmatprep.subr.mxu0 0.0
  %1171 = vmatpush1.msra.mxu0 0.0
  %1172 = vmatprep.subr.mxu0 0.0
  %1173 = vmatpush1.msra.mxu0 0.0
  %1174 = vmatprep.subr.mxu0 0.0
  %1175 = vmatpush1.msra.mxu0 0.0
  %1176 = vmatprep.subr.mxu0 0.0
  %1177 = vmatpush1.msra.mxu0 0.0
  %1178 = vmatprep.subr.mxu0 0.0
  %1179 = vmatpush1.msra.mxu0 0.0
  %1180 = vmatprep.subr.mxu0 0.0
  %1181 = vmatpush1.msra.mxu0 0.0
  %1182 = vmatprep.subr.mxu0 0.0
  %1183 = vmatpush1.msra.mxu0 0.0
  %1184 = vmatprep.subr.mxu0 0.0
  %1185 = vmatpush1.msra.mxu0 0.0
  %1186 = vmatprep.subr.mxu0 0.0
  %1187 = vmatpush1.msra.mxu0 0.0
  %1188 = vmatprep.subr.mxu0 0.0
  %1189 = vmatpush1.msra.mxu0 0.0
  %1190 = vmatprep.subr.mxu0 0.0
  %1191 = vmatpush1.msra.mxu0 0.0
  %1192 = vmatprep.subr.mxu0 0.0
  %1193 = vmatpush1.msra.mxu0 0.0
  %1194 = vmatprep.subr.mxu0 0.0
  %1195 = vmatpush1.msra.mxu0 0.0
  %1196 = vmatprep.subr.mxu0 0.0
  %1197 = vmatpush1.msra.mxu0 0.0
  %1198 = vmatprep.subr.mxu0 0.0
  %1199 = vmatpush1.msra.mxu0 0.0
  %1200 = vmatprep.subr.mxu0 0.0
  %1201 = vmatpush1.msra.mxu0 0.0
  %1202 = vmatprep.mubr.f32.mxu0 0.0
  %1203 = vmatmul.mubr.f32.gmra.mrb[0].mxu0 %v1091
  %v1204 = vpop.f32.mrb[0].mxu0
  %v1205 = vadd.f32 %v1088, %v1204
  %v1206 = vpop.f32.mrb[0].mxu0
  %1207 = vmatprep.mubr.f32.mxu0 0.0
  %1208 = vmatmul.mubr.f32.gmra.mrb[0].mxu0 %v1094
  %v1209 = vpop.f32.mrb[0].mxu0
  %v1210 = vadd.f32 %v1088, %v1209
  %v1211 = vpop.f32.mrb[0].mxu0
  %1212 = vmatprep.mubr.f32.mxu0 0.0
  %1213 = vmatmul.mubr.f32.gmra.mrb[0].mxu0 %v1097
  %v1214 = vpop.f32.mrb[0].mxu0
  %v1215 = vadd.f32 %v1088, %v1214
  %v1216 = vpop.f32.mrb[0].mxu0
  %1217 = vmatprep.mubr.f32.mxu0 0.0
  %1218 = vmatmul.mubr.f32.gmra.mrb[0].mxu0 %v1100
  %v1219 = vpop.f32.mrb[0].mxu0
  %v1220 = vadd.f32 %v1088, %v1219
  %v1221 = vpop.f32.mrb[0].mxu0
  %1222 = vmatprep.mubr.f32.mxu0 0.0
  %1223 = vmatmul.mubr.f32.gmra.mrb[0].mxu0 %v1103
  %v1224 = vpop.f32.mrb[0].mxu0
  %v1225 = vadd.f32 %v1088, %v1224
  %v1226 = vpop.f32.mrb[0].mxu0
  %1227 = vmatprep.mubr.f32.mxu0 0.0
  %1228 = vmatmul.mubr.f32.gmra.mrb[0].mxu0 %v1106
  %v1229 = vpop.f32.mrb[0].mxu0
  %v1230 = vadd.f32 %v1088, %v1229
  %v1231 = vpop.f32.mrb[0].mxu0
  %1232 = vmatprep.mubr.f32.mxu0 0.0
  %1233 = vmatmul.mubr.f32.gmra.mrb[0].mxu0 %v1109
  %v1234 = vpop.f32.mrb[0].mxu0
  %v1235 = vadd.f32 %v1088, %v1234
  %v1236 = vpop.f32.mrb[0].mxu0
  %1237 = vmatprep.mubr.f32.mxu0 0.0
  %1238 = vmatmul.mubr.f32.gmra.mrb[0].mxu0 %v1112
  %v1239 = vpop.f32.mrb[0].mxu0
  %v1240 = vadd.f32 %v1088, %v1239
  %v1241 = vpop.f32.mrb[0].mxu0
  %1242 = vmatprep.mubr.f32.mxu0 0.0
  %1243 = vmatmul.mubr.f32.gmra.mrb[0].mxu0 %v1115
  %v1244 = vpop.f32.mrb[0].mxu0
  %v1245 = vadd.f32 %v1088, %v1244
  %v1246 = vpop.f32.mrb[0].mxu0
  %1247 = vmatprep.mubr.f32.mxu0 0.0
  %1248 = vmatmul.mubr.f32.gmra.mrb[0].mxu0 %v1118
  %v1249 = vpop.f32.mrb[0].mxu0
  %v1250 = vadd.f32 %v1088, %v1249
  %v1251 = vpop.f32.mrb[0].mxu0
  %1252 = vmatprep.mubr.f32.mxu0 0.0
  %1253 = vmatmul.mubr.f32.gmra.mrb[0].mxu0 %v1121
  %v1254 = vpop.f32.mrb[0].mxu0
  %v1255 = vadd.f32 %v1088, %v1254
  %v1256 = vpop.f32.mrb[0].mxu0
  %1257 = vmatprep.mubr.f32.mxu0 0.0
  %1258 = vmatmul.mubr.f32.gmra.mrb[0].mxu0 %v1124
  %v1259 = vpop.f32.mrb[0].mxu0
  %v1260 = vadd.f32 %v1088, %v1259
  %v1261 = vpop.f32.mrb[0].mxu0
  %1262 = vmatprep.mubr.f32.mxu0 0.0
  %1263 = vmatmul.mubr.f32.gmra.mrb[0].mxu0 %v1127
  %v1264 = vpop.f32.mrb[0].mxu0
  %v1265 = vadd.f32 %v1088, %v1264
  %v1266 = vpop.f32.mrb[0].mxu0
  %1267 = vmatprep.mubr.f32.mxu0 0.0
  %1268 = vmatmul.mubr.f32.gmra.mrb[0].mxu0 %v1130
  %v1269 = vpop.f32.mrb[0].mxu0
  %v1270 = vadd.f32 %v1088, %v1269
  %v1271 = vpop.f32.mrb[0].mxu0
  %1272 = vmatprep.mubr.f32.mxu0 0.0
  %1273 = vmatmul.mubr.f32.gmra.mrb[0].mxu0 %v1133
  %v1274 = vpop.f32.mrb[0].mxu0
  %v1275 = vadd.f32 %v1088, %v1274
  %v1276 = vpop.f32.mrb[0].mxu0
  %1277 = vmatprep.mubr.f32.mxu0 0.0
  %1278 = vmatmul.mubr.f32.gmra.mrb[0].mxu0 %v1136
  %v1279 = vpop.f32.mrb[0].mxu0
  %v1280 = vadd.f32 %v1088, %v1279
  %v1281 = vpop.f32.mrb[0].mxu0
  %1282 = vdwg.mxu0
  %v1283 = vld [vmem:[%s9] sm:$0xff]
  %v1284 = vld [vmem:[%s9 + $0x8] sm:$0xff]
  %v1285 = vld [vmem:[%s9 + $0x10] sm:$0xff]
  %v1286 = vld [vmem:[%s9 + $0x18] sm:$0xff]
  %v1287 = vmul.f32 %v1205, 0.5
  %v1288 = vmul.f32 %v1210, 0.5
  %v1289 = vtanh.pop %v1287
  %v1290 = vtanh.pop %v1288
  %v1291 = vmul.f32 %v1289, 0.5
  %v1292 = vmul.f32 %v1290, 0.5
  %v1293 = vadd.f32 %v1291, 0.5
  %v1294 = vadd.f32 %v1292, 0.5
  %v1295 = vtanh.pop %v1205
  %v1296 = vtanh.pop %v1210
  %1299 = vrot.lane.b32.xlu0 %v1295, 64
  %v1300 = vpop.permute.xlu0 %1299
  %1301 = vrot.lane.b32.xlu0 %v1296, 64
  %v1302 = vpop.permute.xlu0 %1301
  %v1305 = vmul.f32 %v1293, %v1300
  %v1306 = vmul.f32 %v1294, %v1302
  %v1307 = vtanh.pop %v1305
  %v1308 = vtanh.pop %v1306
  %1311 = vrot.lane.b32.xlu0 %v1307, 96
  %v1312 = vpop.permute.xlu0 %1311
  %1313 = vrot.lane.b32.xlu0 %v1308, 96
  %v1314 = vpop.permute.xlu0 %1313
  %v1317 = vmul.f32 %v1293, %v1312
  %v1318 = vmul.f32 %v1294, %v1314
  %1321 = vrot.lane.b32.xlu0 %v1317, 32
  %v1322 = vpop.permute.xlu0 %1321
  %1323 = vrot.lane.b32.xlu0 %v1318, 32
  %v1324 = vpop.permute.xlu0 %1323
  %v1325 = vsel %vm837, %v1322, 0
  %v1327 = vsel %vm837, %v1324, 0
  %1329 = vmatprep.subr.mxu0 0.0
  %1330 = vmatpush1.msra.mxu0 %v1283
  %1331 = vmatprep.subr.mxu0 0.0
  %1332 = vmatpush1.msra.mxu0 %v1284
  %1333 = vmatprep.subr.mxu0 0.0
  %1334 = vmatpush1.msra.mxu0 %v1285
  %1335 = vmatprep.subr.mxu0 0.0
  %1336 = vmatpush1.msra.mxu0 %v1286
  %1337 = vmatprep.subr.mxu0 0.0
  %1338 = vmatpush1.msra.mxu0 0.0
  %1339 = vmatprep.subr.mxu0 0.0
  %1340 = vmatpush1.msra.mxu0 0.0
  %1341 = vmatprep.subr.mxu0 0.0
  %1342 = vmatpush1.msra.mxu0 0.0
  %1343 = vmatprep.subr.mxu0 0.0
  %1344 = vmatpush1.msra.mxu0 0.0
  %1345 = vmatprep.subr.mxu0 0.0
  %1346 = vmatpush1.msra.mxu0 0.0
  %1347 = vmatprep.subr.mxu0 0.0
  %1348 = vmatpush1.msra.mxu0 0.0
  %1349 = vmatprep.subr.mxu0 0.0
  %1350 = vmatpush1.msra.mxu0 0.0
  %1351 = vmatprep.subr.mxu0 0.0
  %1352 = vmatpush1.msra.mxu0 0.0
  %1353 = vmatprep.subr.mxu0 0.0
  %1354 = vmatpush1.msra.mxu0 0.0
  %1355 = vmatprep.subr.mxu0 0.0
  %1356 = vmatpush1.msra.mxu0 0.0
  %1357 = vmatprep.subr.mxu0 0.0
  %1358 = vmatpush1.msra.mxu0 0.0
  %1359 = vmatprep.subr.mxu0 0.0
  %1360 = vmatpush1.msra.mxu0 0.0
  %1361 = vmatprep.subr.mxu0 0.0
  %1362 = vmatpush1.msra.mxu0 0.0
  %1363 = vmatprep.subr.mxu0 0.0
  %1364 = vmatpush1.msra.mxu0 0.0
  %1365 = vmatprep.subr.mxu0 0.0
  %1366 = vmatpush1.msra.mxu0 0.0
  %1367 = vmatprep.subr.mxu0 0.0
  %1368 = vmatpush1.msra.mxu0 0.0
  %1369 = vmatprep.subr.mxu0 0.0
  %1370 = vmatpush1.msra.mxu0 0.0
  %1371 = vmatprep.subr.mxu0 0.0
  %1372 = vmatpush1.msra.mxu0 0.0
  %1373 = vmatprep.subr.mxu0 0.0
  %1374 = vmatpush1.msra.mxu0 0.0
  %1375 = vmatprep.subr.mxu0 0.0
  %1376 = vmatpush1.msra.mxu0 0.0
  %1377 = vmatprep.subr.mxu0 0.0
  %1378 = vmatpush1.msra.mxu0 0.0
  %1379 = vmatprep.subr.mxu0 0.0
  %1380 = vmatpush1.msra.mxu0 0.0
  %1381 = vmatprep.subr.mxu0 0.0
  %1382 = vmatpush1.msra.mxu0 0.0
  %1383 = vmatprep.subr.mxu0 0.0
  %1384 = vmatpush1.msra.mxu0 0.0
  %1385 = vmatprep.subr.mxu0 0.0
  %1386 = vmatpush1.msra.mxu0 0.0
  %1387 = vmatprep.subr.mxu0 0.0
  %1388 = vmatpush1.msra.mxu0 0.0
  %1389 = vmatprep.subr.mxu0 0.0
  %1390 = vmatpush1.msra.mxu0 0.0
  %1391 = vmatprep.subr.mxu0 0.0
  %1392 = vmatpush1.msra.mxu0 0.0
  %1393 = vmatprep.mubr.f32.mxu0 0.0
  %1394 = vmatmul.mubr.f32.gmra.mrb[0].mxu0 %v1325
  %v1395 = vpop.f32.mrb[0].mxu0
  %v1396 = vadd.f32 0.0, %v1395
  %v1397 = vpop.f32.mrb[0].mxu0
  %1398 = vmatprep.mubr.f32.mxu0 0.0
  %1399 = vmatmul.mubr.f32.gmra.mrb[0].mxu0 %v1327
  %v1400 = vpop.f32.mrb[0].mxu0
  %v1401 = vadd.f32 0.0, %v1400
  %v1402 = vpop.f32.mrb[0].mxu0
  %1403 = vdwg.mxu0
  %v1404 = vadd.f32 %v1215, %v1396
  %v1405 = vadd.f32 %v1220, %v1401
  %v1406 = vmul.f32 %v1404, 0.5
  %v1407 = vmul.f32 %v1405, 0.5
  %v1408 = vtanh.pop %v1406
  %v1409 = vtanh.pop %v1407
  %v1410 = vmul.f32 %v1408, 0.5
  %v1411 = vmul.f32 %v1409, 0.5
  %v1412 = vadd.f32 %v1410, 0.5
  %v1413 = vadd.f32 %v1411, 0.5
  %v1414 = vtanh.pop %v1404
  %v1415 = vtanh.pop %v1405
  %1418 = vrot.lane.b32.xlu0 %v1414, 64
  %v1419 = vpop.permute.xlu0 %1418
  %1420 = vrot.lane.b32.xlu0 %v1415, 64
  %v1421 = vpop.permute.xlu0 %1420
  %v1424 = vmul.f32 %v1412, %v1419
  %v1425 = vmul.f32 %v1413, %v1421
  %1428 = vrot.lane.b32.xlu0 %v1305, 32
  %v1429 = vpop.permute.xlu0 %1428
  %1430 = vrot.lane.b32.xlu0 %v1306, 32
  %v1431 = vpop.permute.xlu0 %1430
  %v1434 = vmul.f32 %v1412, %v1429
  %v1435 = vmul.f32 %v1413, %v1431
  %1438 = vrot.lane.b32.xlu0 %v1424, 32
  %v1439 = vpop.permute.xlu0 %1438
  %1440 = vrot.lane.b32.xlu0 %v1425, 32
  %v1441 = vpop.permute.xlu0 %1440
  %v1444 = vadd.f32 %v1434, %v1439
  %v1445 = vadd.f32 %v1435, %v1441
  %v1446 = vtanh.pop %v1444
  %v1447 = vtanh.pop %v1445
  %1450 = vrot.lane.b32.xlu0 %v1446, 64
  %v1451 = vpop.permute.xlu0 %1450
  %1452 = vrot.lane.b32.xlu0 %v1447, 64
  %v1453 = vpop.permute.xlu0 %1452
  %v1456 = vmul.f32 %v1412, %v1451
  %v1457 = vmul.f32 %v1413, %v1453
  %1460 = vrot.lane.b32.xlu0 %v1456, 32
  %v1461 = vpop.permute.xlu0 %1460
  %1462 = vrot.lane.b32.xlu0 %v1457, 32
  %v1463 = vpop.permute.xlu0 %1462
  %v1464 = vsel %vm837, %v1461, 0
  %v1466 = vsel %vm837, %v1463, 0
  %1468 = vmatprep.subr.mxu0 0.0
  %1469 = vmatpush1.msra.mxu0 %v1283
  %1470 = vmatprep.subr.mxu0 0.0
  %1471 = vmatpush1.msra.mxu0 %v1284
  %1472 = vmatprep.subr.mxu0 0.0
  %1473 = vmatpush1.msra.mxu0 %v1285
  %1474 = vmatprep.subr.mxu0 0.0
  %1475 = vmatpush1.msra.mxu0 %v1286
  %1476 = vmatprep.subr.mxu0 0.0
  %1477 = vmatpush1.msra.mxu0 0.0
  %1478 = vmatprep.subr.mxu0 0.0
  %1479 = vmatpush1.msra.mxu0 0.0
  %1480 = vmatprep.subr.mxu0 0.0
  %1481 = vmatpush1.msra.mxu0 0.0
  %1482 = vmatprep.subr.mxu0 0.0
  %1483 = vmatpush1.msra.mxu0 0.0
  %1484 = vmatprep.subr.mxu0 0.0
  %1485 = vmatpush1.msra.mxu0 0.0
  %1486 = vmatprep.subr.mxu0 0.0
  %1487 = vmatpush1.msra.mxu0 0.0
  %1488 = vmatprep.subr.mxu0 0.0
  %1489 = vmatpush1.msra.mxu0 0.0
  %1490 = vmatprep.subr.mxu0 0.0
  %1491 = vmatpush1.msra.mxu0 0.0
  %1492 = vmatprep.subr.mxu0 0.0
  %1493 = vmatpush1.msra.mxu0 0.0
  %1494 = vmatprep.subr.mxu0 0.0
  %1495 = vmatpush1.msra.mxu0 0.0
  %1496 = vmatprep.subr.mxu0 0.0
  %1497 = vmatpush1.msra.mxu0 0.0
  %1498 = vmatprep.subr.mxu0 0.0
  %1499 = vmatpush1.msra.mxu0 0.0
  %1500 = vmatprep.subr.mxu0 0.0
  %1501 = vmatpush1.msra.mxu0 0.0
  %1502 = vmatprep.subr.mxu0 0.0
  %1503 = vmatpush1.msra.mxu0 0.0
  %1504 = vmatprep.subr.mxu0 0.0
  %1505 = vmatpush1.msra.mxu0 0.0
  %1506 = vmatprep.subr.mxu0 0.0
  %1507 = vmatpush1.msra.mxu0 0.0
  %1508 = vmatprep.subr.mxu0 0.0
  %1509 = vmatpush1.msra.mxu0 0.0
  %1510 = vmatprep.subr.mxu0 0.0
  %1511 = vmatpush1.msra.mxu0 0.0
  %1512 = vmatprep.subr.mxu0 0.0
  %1513 = vmatpush1.msra.mxu0 0.0
  %1514 = vmatprep.subr.mxu0 0.0
  %1515 = vmatpush1.msra.mxu0 0.0
  %1516 = vmatprep.subr.mxu0 0.0
  %1517 = vmatpush1.msra.mxu0 0.0
  %1518 = vmatprep.subr.mxu0 0.0
  %1519 = vmatpush1.msra.mxu0 0.0
  %1520 = vmatprep.subr.mxu0 0.0
  %1521 = vmatpush1.msra.mxu0 0.0
  %1522 = vmatprep.subr.mxu0 0.0
  %1523 = vmatpush1.msra.mxu0 0.0
  %1524 = vmatprep.subr.mxu0 0.0
  %1525 = vmatpush1.msra.mxu0 0.0
  %1526 = vmatprep.subr.mxu0 0.0
  %1527 = vmatpush1.msra.mxu0 0.0
  %1528 = vmatprep.subr.mxu0 0.0
  %1529 = vmatpush1.msra.mxu0 0.0
  %1530 = vmatprep.subr.mxu0 0.0
  %1531 = vmatpush1.msra.mxu0 0.0
  %1532 = vmatprep.mubr.f32.mxu0 0.0
  %1533 = vmatmul.mubr.f32.gmra.mrb[0].mxu0 %v1464
  %v1534 = vpop.f32.mrb[0].mxu0
  %v1535 = vadd.f32 0.0, %v1534
  %v1536 = vpop.f32.mrb[0].mxu0
  %1537 = vmatprep.mubr.f32.mxu0 0.0
  %1538 = vmatmul.mubr.f32.gmra.mrb[0].mxu0 %v1466
  %v1539 = vpop.f32.mrb[0].mxu0
  %v1540 = vadd.f32 0.0, %v1539
  %v1541 = vpop.f32.mrb[0].mxu0
  %1542 = vdwg.mxu0
  %v1543 = vadd.f32 %v1225, %v1535
  %v1544 = vadd.f32 %v1230, %v1540
  %v1545 = vmul.f32 %v1543, 0.5
  %v1546 = vmul.f32 %v1544, 0.5
  %v1547 = vtanh.pop %v1545
  %v1548 = vtanh.pop %v1546
  %v1549 = vmul.f32 %v1547, 0.5
  %v1550 = vmul.f32 %v1548, 0.5
  %v1551 = vadd.f32 %v1549, 0.5
  %v1552 = vadd.f32 %v1550, 0.5
  %v1553 = vtanh.pop %v1543
  %v1554 = vtanh.pop %v1544
  %1557 = vrot.lane.b32.xlu0 %v1553, 64
  %v1558 = vpop.permute.xlu0 %1557
  %1559 = vrot.lane.b32.xlu0 %v1554, 64
  %v1560 = vpop.permute.xlu0 %1559
  %v1563 = vmul.f32 %v1551, %v1558
  %v1564 = vmul.f32 %v1552, %v1560
  %v1565 = vmul.f32 %v1551, %v1444
  %v1566 = vmul.f32 %v1552, %v1445
  %1569 = vrot.lane.b32.xlu0 %v1563, 32
  %v1570 = vpop.permute.xlu0 %1569
  %1571 = vrot.lane.b32.xlu0 %v1564, 32
  %v1572 = vpop.permute.xlu0 %1571
  %v1575 = vadd.f32 %v1565, %v1570
  %v1576 = vadd.f32 %v1566, %v1572
  %v1577 = vtanh.pop %v1575
  %v1578 = vtanh.pop %v1576
  %1581 = vrot.lane.b32.xlu0 %v1577, 64
  %v1582 = vpop.permute.xlu0 %1581
  %1583 = vrot.lane.b32.xlu0 %v1578, 64
  %v1584 = vpop.permute.xlu0 %1583
  %v1587 = vmul.f32 %v1551, %v1582
  %v1588 = vmul.f32 %v1552, %v1584
  %1591 = vrot.lane.b32.xlu0 %v1587, 32
  %v1592 = vpop.permute.xlu0 %1591
  %1593 = vrot.lane.b32.xlu0 %v1588, 32
  %v1594 = vpop.permute.xlu0 %1593
  %v1595 = vsel %vm837, %v1592, 0
  %v1597 = vsel %vm837, %v1594, 0
  %1599 = vmatprep.subr.mxu0 0.0
  %1600 = vmatpush1.msra.mxu0 %v1283
  %1601 = vmatprep.subr.mxu0 0.0
  %1602 = vmatpush1.msra.mxu0 %v1284
  %1603 = vmatprep.subr.mxu0 0.0
  %1604 = vmatpush1.msra.mxu0 %v1285
  %1605 = vmatprep.subr.mxu0 0.0
  %1606 = vmatpush1.msra.mxu0 %v1286
  %1607 = vmatprep.subr.mxu0 0.0
  %1608 = vmatpush1.msra.mxu0 0.0
  %1609 = vmatprep.subr.mxu0 0.0
  %1610 = vmatpush1.msra.mxu0 0.0
  %1611 = vmatprep.subr.mxu0 0.0
  %1612 = vmatpush1.msra.mxu0 0.0
  %1613 = vmatprep.subr.mxu0 0.0
  %1614 = vmatpush1.msra.mxu0 0.0
  %1615 = vmatprep.subr.mxu0 0.0
  %1616 = vmatpush1.msra.mxu0 0.0
  %1617 = vmatprep.subr.mxu0 0.0
  %1618 = vmatpush1.msra.mxu0 0.0
  %1619 = vmatprep.subr.mxu0 0.0
  %1620 = vmatpush1.msra.mxu0 0.0
  %1621 = vmatprep.subr.mxu0 0.0
  %1622 = vmatpush1.msra.mxu0 0.0
  %1623 = vmatprep.subr.mxu0 0.0
  %1624 = vmatpush1.msra.mxu0 0.0
  %1625 = vmatprep.subr.mxu0 0.0
  %1626 = vmatpush1.msra.mxu0 0.0
  %1627 = vmatprep.subr.mxu0 0.0
  %1628 = vmatpush1.msra.mxu0 0.0
  %1629 = vmatprep.subr.mxu0 0.0
  %1630 = vmatpush1.msra.mxu0 0.0
  %1631 = vmatprep.subr.mxu0 0.0
  %1632 = vmatpush1.msra.mxu0 0.0
  %1633 = vmatprep.subr.mxu0 0.0
  %1634 = vmatpush1.msra.mxu0 0.0
  %1635 = vmatprep.subr.mxu0 0.0
  %1636 = vmatpush1.msra.mxu0 0.0
  %1637 = vmatprep.subr.mxu0 0.0
  %1638 = vmatpush1.msra.mxu0 0.0
  %1639 = vmatprep.subr.mxu0 0.0
  %1640 = vmatpush1.msra.mxu0 0.0
  %1641 = vmatprep.subr.mxu0 0.0
  %1642 = vmatpush1.msra.mxu0 0.0
  %1643 = vmatprep.subr.mxu0 0.0
  %1644 = vmatpush1.msra.mxu0 0.0
  %1645 = vmatprep.subr.mxu0 0.0
  %1646 = vmatpush1.msra.mxu0 0.0
  %1647 = vmatprep.subr.mxu0 0.0
  %1648 = vmatpush1.msra.mxu0 0.0
  %1649 = vmatprep.subr.mxu0 0.0
  %1650 = vmatpush1.msra.mxu0 0.0
  %1651 = vmatprep.subr.mxu0 0.0
  %1652 = vmatpush1.msra.mxu0 0.0
  %1653 = vmatprep.subr.mxu0 0.0
  %1654 = vmatpush1.msra.mxu0 0.0
  %1655 = vmatprep.subr.mxu0 0.0
  %1656 = vmatpush1.msra.mxu0 0.0
  %1657 = vmatprep.subr.mxu0 0.0
  %1658 = vmatpush1.msra.mxu0 0.0
  %1659 = vmatprep.subr.mxu0 0.0
  %1660 = vmatpush1.msra.mxu0 0.0
  %1661 = vmatprep.subr.mxu0 0.0
  %1662 = vmatpush1.msra.mxu0 0.0
  %1663 = vmatprep.mubr.f32.mxu0 0.0
  %1664 = vmatmul.mubr.f32.gmra.mrb[0].mxu0 %v1595
  %v1665 = vpop.f32.mrb[0].mxu0
  %v1666 = vadd.f32 0.0, %v1665
  %v1667 = vpop.f32.mrb[0].mxu0
  %1668 = vmatprep.mubr.f32.mxu0 0.0
  %1669 = vmatmul.mubr.f32.gmra.mrb[0].mxu0 %v1597
  %v1670 = vpop.f32.mrb[0].mxu0
  %v1671 = vadd.f32 0.0, %v1670
  %v1672 = vpop.f32.mrb[0].mxu0
  %1673 = vdwg.mxu0
  %v1674 = vadd.f32 %v1235, %v1666
  %v1675 = vadd.f32 %v1240, %v1671
  %v1676 = vmul.f32 %v1674, 0.5
  %v1677 = vmul.f32 %v1675, 0.5
  %v1678 = vtanh.pop %v1676
  %v1679 = vtanh.pop %v1677
  %v1680 = vmul.f32 %v1678, 0.5
  %v1681 = vmul.f32 %v1679, 0.5
  %v1682 = vadd.f32 %v1680, 0.5
  %v1683 = vadd.f32 %v1681, 0.5
  %v1684 = vtanh.pop %v1674
  %v1685 = vtanh.pop %v1675
  %1688 = vrot.lane.b32.xlu0 %v1684, 64
  %v1689 = vpop.permute.xlu0 %1688
  %1690 = vrot.lane.b32.xlu0 %v1685, 64
  %v1691 = vpop.permute.xlu0 %1690
  %v1694 = vmul.f32 %v1682, %v1689
  %v1695 = vmul.f32 %v1683, %v1691
  %v1696 = vmul.f32 %v1682, %v1575
  %v1697 = vmul.f32 %v1683, %v1576
  %1700 = vrot.lane.b32.xlu0 %v1694, 32
  %v1701 = vpop.permute.xlu0 %1700
  %1702 = vrot.lane.b32.xlu0 %v1695, 32
  %v1703 = vpop.permute.xlu0 %1702
  %v1706 = vadd.f32 %v1696, %v1701
  %v1707 = vadd.f32 %v1697, %v1703
  %v1708 = vtanh.pop %v1706
  %v1709 = vtanh.pop %v1707
  %1712 = vrot.lane.b32.xlu0 %v1708, 64
  %v1713 = vpop.permute.xlu0 %1712
  %1714 = vrot.lane.b32.xlu0 %v1709, 64
  %v1715 = vpop.permute.xlu0 %1714
  %v1718 = vmul.f32 %v1682, %v1713
  %v1719 = vmul.f32 %v1683, %v1715
  %1722 = vrot.lane.b32.xlu0 %v1718, 32
  %v1723 = vpop.permute.xlu0 %1722
  %1724 = vrot.lane.b32.xlu0 %v1719, 32
  %v1725 = vpop.permute.xlu0 %1724
  %v1726 = vsel %vm837, %v1723, 0
  %v1728 = vsel %vm837, %v1725, 0
  %1730 = vmatprep.subr.mxu0 0.0
  %1731 = vmatpush1.msra.mxu0 %v1283
  %1732 = vmatprep.subr.mxu0 0.0
  %1733 = vmatpush1.msra.mxu0 %v1284
  %1734 = vmatprep.subr.mxu0 0.0
  %1735 = vmatpush1.msra.mxu0 %v1285
  %1736 = vmatprep.subr.mxu0 0.0
  %1737 = vmatpush1.msra.mxu0 %v1286
  %1738 = vmatprep.subr.mxu0 0.0
  %1739 = vmatpush1.msra.mxu0 0.0
  %1740 = vmatprep.subr.mxu0 0.0
  %1741 = vmatpush1.msra.mxu0 0.0
  %1742 = vmatprep.subr.mxu0 0.0
  %1743 = vmatpush1.msra.mxu0 0.0
  %1744 = vmatprep.subr.mxu0 0.0
  %1745 = vmatpush1.msra.mxu0 0.0
  %1746 = vmatprep.subr.mxu0 0.0
  %1747 = vmatpush1.msra.mxu0 0.0
  %1748 = vmatprep.subr.mxu0 0.0
  %1749 = vmatpush1.msra.mxu0 0.0
  %1750 = vmatprep.subr.mxu0 0.0
  %1751 = vmatpush1.msra.mxu0 0.0
  %1752 = vmatprep.subr.mxu0 0.0
  %1753 = vmatpush1.msra.mxu0 0.0
  %1754 = vmatprep.subr.mxu0 0.0
  %1755 = vmatpush1.msra.mxu0 0.0
  %1756 = vmatprep.subr.mxu0 0.0
  %1757 = vmatpush1.msra.mxu0 0.0
  %1758 = vmatprep.subr.mxu0 0.0
  %1759 = vmatpush1.msra.mxu0 0.0
  %1760 = vmatprep.subr.mxu0 0.0
  %1761 = vmatpush1.msra.mxu0 0.0
  %1762 = vmatprep.subr.mxu0 0.0
  %1763 = vmatpush1.msra.mxu0 0.0
  %1764 = vmatprep.subr.mxu0 0.0
  %1765 = vmatpush1.msra.mxu0 0.0
  %1766 = vmatprep.subr.mxu0 0.0
  %1767 = vmatpush1.msra.mxu0 0.0
  %1768 = vmatprep.subr.mxu0 0.0
  %1769 = vmatpush1.msra.mxu0 0.0
  %1770 = vmatprep.subr.mxu0 0.0
  %1771 = vmatpush1.msra.mxu0 0.0
  %1772 = vmatprep.subr.mxu0 0.0
  %1773 = vmatpush1.msra.mxu0 0.0
  %1774 = vmatprep.subr.mxu0 0.0
  %1775 = vmatpush1.msra.mxu0 0.0
  %1776 = vmatprep.subr.mxu0 0.0
  %1777 = vmatpush1.msra.mxu0 0.0
  %1778 = vmatprep.subr.mxu0 0.0
  %1779 = vmatpush1.msra.mxu0 0.0
  %1780 = vmatprep.subr.mxu0 0.0
  %1781 = vmatpush1.msra.mxu0 0.0
  %1782 = vmatprep.subr.mxu0 0.0
  %1783 = vmatpush1.msra.mxu0 0.0
  %1784 = vmatprep.subr.mxu0 0.0
  %1785 = vmatpush1.msra.mxu0 0.0
  %1786 = vmatprep.subr.mxu0 0.0
  %1787 = vmatpush1.msra.mxu0 0.0
  %1788 = vmatprep.subr.mxu0 0.0
  %1789 = vmatpush1.msra.mxu0 0.0
  %1790 = vmatprep.subr.mxu0 0.0
  %1791 = vmatpush1.msra.mxu0 0.0
  %1792 = vmatprep.subr.mxu0 0.0
  %1793 = vmatpush1.msra.mxu0 0.0
  %1794 = vmatprep.mubr.f32.mxu0 0.0
  %1795 = vmatmul.mubr.f32.gmra.mrb[0].mxu0 %v1726
  %v1796 = vpop.f32.mrb[0].mxu0
  %v1797 = vadd.f32 0.0, %v1796
  %v1798 = vpop.f32.mrb[0].mxu0
  %1799 = vmatprep.mubr.f32.mxu0 0.0
  %1800 = vmatmul.mubr.f32.gmra.mrb[0].mxu0 %v1728
  %v1801 = vpop.f32.mrb[0].mxu0
  %v1802 = vadd.f32 0.0, %v1801
  %v1803 = vpop.f32.mrb[0].mxu0
  %1804 = vdwg.mxu0
  %v1805 = vadd.f32 %v1245, %v1797
  %v1806 = vadd.f32 %v1250, %v1802
  %v1807 = vmul.f32 %v1805, 0.5
  %v1808 = vmul.f32 %v1806, 0.5
  %v1809 = vtanh.pop %v1807
  %v1810 = vtanh.pop %v1808
  %v1811 = vmul.f32 %v1809, 0.5
  %v1812 = vmul.f32 %v1810, 0.5
  %v1813 = vadd.f32 %v1811, 0.5
  %v1814 = vadd.f32 %v1812, 0.5
  %v1815 = vtanh.pop %v1805
  %v1816 = vtanh.pop %v1806
  %1819 = vrot.lane.b32.xlu0 %v1815, 64
  %v1820 = vpop.permute.xlu0 %1819
  %1821 = vrot.lane.b32.xlu0 %v1816, 64
  %v1822 = vpop.permute.xlu0 %1821
  %v1825 = vmul.f32 %v1813, %v1820
  %v1826 = vmul.f32 %v1814, %v1822
  %v1827 = vmul.f32 %v1813, %v1706
  %v1828 = vmul.f32 %v1814, %v1707
  %1831 = vrot.lane.b32.xlu0 %v1825, 32
  %v1832 = vpop.permute.xlu0 %1831
  %1833 = vrot.lane.b32.xlu0 %v1826, 32
  %v1834 = vpop.permute.xlu0 %1833
  %v1837 = vadd.f32 %v1827, %v1832
  %v1838 = vadd.f32 %v1828, %v1834
  %v1839 = vtanh.pop %v1837
  %v1840 = vtanh.pop %v1838
  %1843 = vrot.lane.b32.xlu0 %v1839, 64
  %v1844 = vpop.permute.xlu0 %1843
  %1845 = vrot.lane.b32.xlu0 %v1840, 64
  %v1846 = vpop.permute.xlu0 %1845
  %v1849 = vmul.f32 %v1813, %v1844
  %v1850 = vmul.f32 %v1814, %v1846
  %1853 = vrot.lane.b32.xlu0 %v1849, 32
  %v1854 = vpop.permute.xlu0 %1853
  %1855 = vrot.lane.b32.xlu0 %v1850, 32
  %v1856 = vpop.permute.xlu0 %1855
  %v1857 = vsel %vm837, %v1854, 0
  %v1859 = vsel %vm837, %v1856, 0
  %1861 = vmatprep.subr.mxu0 0.0
  %1862 = vmatpush1.msra.mxu0 %v1283
  %1863 = vmatprep.subr.mxu0 0.0
  %1864 = vmatpush1.msra.mxu0 %v1284
  %1865 = vmatprep.subr.mxu0 0.0
  %1866 = vmatpush1.msra.mxu0 %v1285
  %1867 = vmatprep.subr.mxu0 0.0
  %1868 = vmatpush1.msra.mxu0 %v1286
  %1869 = vmatprep.subr.mxu0 0.0
  %1870 = vmatpush1.msra.mxu0 0.0
  %1871 = vmatprep.subr.mxu0 0.0
  %1872 = vmatpush1.msra.mxu0 0.0
  %1873 = vmatprep.subr.mxu0 0.0
  %1874 = vmatpush1.msra.mxu0 0.0
  %1875 = vmatprep.subr.mxu0 0.0
  %1876 = vmatpush1.msra.mxu0 0.0
  %1877 = vmatprep.subr.mxu0 0.0
  %1878 = vmatpush1.msra.mxu0 0.0
  %1879 = vmatprep.subr.mxu0 0.0
  %1880 = vmatpush1.msra.mxu0 0.0
  %1881 = vmatprep.subr.mxu0 0.0
  %1882 = vmatpush1.msra.mxu0 0.0
  %1883 = vmatprep.subr.mxu0 0.0
  %1884 = vmatpush1.msra.mxu0 0.0
  %1885 = vmatprep.subr.mxu0 0.0
  %1886 = vmatpush1.msra.mxu0 0.0
  %1887 = vmatprep.subr.mxu0 0.0
  %1888 = vmatpush1.msra.mxu0 0.0
  %1889 = vmatprep.subr.mxu0 0.0
  %1890 = vmatpush1.msra.mxu0 0.0
  %1891 = vmatprep.subr.mxu0 0.0
  %1892 = vmatpush1.msra.mxu0 0.0
  %1893 = vmatprep.subr.mxu0 0.0
  %1894 = vmatpush1.msra.mxu0 0.0
  %1895 = vmatprep.subr.mxu0 0.0
  %1896 = vmatpush1.msra.mxu0 0.0
  %1897 = vmatprep.subr.mxu0 0.0
  %1898 = vmatpush1.msra.mxu0 0.0
  %1899 = vmatprep.subr.mxu0 0.0
  %1900 = vmatpush1.msra.mxu0 0.0
  %1901 = vmatprep.subr.mxu0 0.0
  %1902 = vmatpush1.msra.mxu0 0.0
  %1903 = vmatprep.subr.mxu0 0.0
  %1904 = vmatpush1.msra.mxu0 0.0
  %1905 = vmatprep.subr.mxu0 0.0
  %1906 = vmatpush1.msra.mxu0 0.0
  %1907 = vmatprep.subr.mxu0 0.0
  %1908 = vmatpush1.msra.mxu0 0.0
  %1909 = vmatprep.subr.mxu0 0.0
  %1910 = vmatpush1.msra.mxu0 0.0
  %1911 = vmatprep.subr.mxu0 0.0
  %1912 = vmatpush1.msra.mxu0 0.0
  %1913 = vmatprep.subr.mxu0 0.0
  %1914 = vmatpush1.msra.mxu0 0.0
  %1915 = vmatprep.subr.mxu0 0.0
  %1916 = vmatpush1.msra.mxu0 0.0
  %1917 = vmatprep.subr.mxu0 0.0
  %1918 = vmatpush1.msra.mxu0 0.0
  %1919 = vmatprep.subr.mxu0 0.0
  %1920 = vmatpush1.msra.mxu0 0.0
  %1921 = vmatprep.subr.mxu0 0.0
  %1922 = vmatpush1.msra.mxu0 0.0
  %1923 = vmatprep.subr.mxu0 0.0
  %1924 = vmatpush1.msra.mxu0 0.0
  %1925 = vmatprep.mubr.f32.mxu0 0.0
  %1926 = vmatmul.mubr.f32.gmra.mrb[0].mxu0 %v1857
  %v1927 = vpop.f32.mrb[0].mxu0
  %v1928 = vadd.f32 0.0, %v1927
  %v1929 = vpop.f32.mrb[0].mxu0
  %1930 = vmatprep.mubr.f32.mxu0 0.0
  %1931 = vmatmul.mubr.f32.gmra.mrb[0].mxu0 %v1859
  %v1932 = vpop.f32.mrb[0].mxu0
  %v1933 = vadd.f32 0.0, %v1932
  %v1934 = vpop.f32.mrb[0].mxu0
  %1935 = vdwg.mxu0
  %v1936 = vadd.f32 %v1255, %v1928
  %v1937 = vadd.f32 %v1260, %v1933
  %v1938 = vmul.f32 %v1936, 0.5
  %v1939 = vmul.f32 %v1937, 0.5
  %v1940 = vtanh.pop %v1938
  %v1941 = vtanh.pop %v1939
  %v1942 = vmul.f32 %v1940, 0.5
  %v1943 = vmul.f32 %v1941, 0.5
  %v1944 = vadd.f32 %v1942, 0.5
  %v1945 = vadd.f32 %v1943, 0.5
  %v1946 = vtanh.pop %v1936
  %v1947 = vtanh.pop %v1937
  %1950 = vrot.lane.b32.xlu0 %v1946, 64
  %v1951 = vpop.permute.xlu0 %1950
  %1952 = vrot.lane.b32.xlu0 %v1947, 64
  %v1953 = vpop.permute.xlu0 %1952
  %v1956 = vmul.f32 %v1944, %v1951
  %v1957 = vmul.f32 %v1945, %v1953
  %v1958 = vmul.f32 %v1944, %v1837
  %v1959 = vmul.f32 %v1945, %v1838
  %1962 = vrot.lane.b32.xlu0 %v1956, 32
  %v1963 = vpop.permute.xlu0 %1962
  %1964 = vrot.lane.b32.xlu0 %v1957, 32
  %v1965 = vpop.permute.xlu0 %1964
  %v1968 = vadd.f32 %v1958, %v1963
  %v1969 = vadd.f32 %v1959, %v1965
  %v1970 = vtanh.pop %v1968
  %v1971 = vtanh.pop %v1969
  %1974 = vrot.lane.b32.xlu0 %v1970, 64
  %v1975 = vpop.permute.xlu0 %1974
  %1976 = vrot.lane.b32.xlu0 %v1971, 64
  %v1977 = vpop.permute.xlu0 %1976
  %v1980 = vmul.f32 %v1944, %v1975
  %v1981 = vmul.f32 %v1945, %v1977
  %1984 = vrot.lane.b32.xlu0 %v1980, 32
  %v1985 = vpop.permute.xlu0 %1984
  %1986 = vrot.lane.b32.xlu0 %v1981, 32
  %v1987 = vpop.permute.xlu0 %1986
  %v1988 = vsel %vm837, %v1985, 0
  %v1990 = vsel %vm837, %v1987, 0
  %1992 = vmatprep.subr.mxu0 0.0
  %1993 = vmatpush1.msra.mxu0 %v1283
  %1994 = vmatprep.subr.mxu0 0.0
  %1995 = vmatpush1.msra.mxu0 %v1284
  %1996 = vmatprep.subr.mxu0 0.0
  %1997 = vmatpush1.msra.mxu0 %v1285
  %1998 = vmatprep.subr.mxu0 0.0
  %1999 = vmatpush1.msra.mxu0 %v1286
  %2000 = vmatprep.subr.mxu0 0.0
  %2001 = vmatpush1.msra.mxu0 0.0
  %2002 = vmatprep.subr.mxu0 0.0
  %2003 = vmatpush1.msra.mxu0 0.0
  %2004 = vmatprep.subr.mxu0 0.0
  %2005 = vmatpush1.msra.mxu0 0.0
  %2006 = vmatprep.subr.mxu0 0.0
  %2007 = vmatpush1.msra.mxu0 0.0
  %2008 = vmatprep.subr.mxu0 0.0
  %2009 = vmatpush1.msra.mxu0 0.0
  %2010 = vmatprep.subr.mxu0 0.0
  %2011 = vmatpush1.msra.mxu0 0.0
  %2012 = vmatprep.subr.mxu0 0.0
  %2013 = vmatpush1.msra.mxu0 0.0
  %2014 = vmatprep.subr.mxu0 0.0
  %2015 = vmatpush1.msra.mxu0 0.0
  %2016 = vmatprep.subr.mxu0 0.0
  %2017 = vmatpush1.msra.mxu0 0.0
  %2018 = vmatprep.subr.mxu0 0.0
  %2019 = vmatpush1.msra.mxu0 0.0
  %2020 = vmatprep.subr.mxu0 0.0
  %2021 = vmatpush1.msra.mxu0 0.0
  %2022 = vmatprep.subr.mxu0 0.0
  %2023 = vmatpush1.msra.mxu0 0.0
  %2024 = vmatprep.subr.mxu0 0.0
  %2025 = vmatpush1.msra.mxu0 0.0
  %2026 = vmatprep.subr.mxu0 0.0
  %2027 = vmatpush1.msra.mxu0 0.0
  %2028 = vmatprep.subr.mxu0 0.0
  %2029 = vmatpush1.msra.mxu0 0.0
  %2030 = vmatprep.subr.mxu0 0.0
  %2031 = vmatpush1.msra.mxu0 0.0
  %2032 = vmatprep.subr.mxu0 0.0
  %2033 = vmatpush1.msra.mxu0 0.0
  %2034 = vmatprep.subr.mxu0 0.0
  %2035 = vmatpush1.msra.mxu0 0.0
  %2036 = vmatprep.subr.mxu0 0.0
  %2037 = vmatpush1.msra.mxu0 0.0
  %2038 = vmatprep.subr.mxu0 0.0
  %2039 = vmatpush1.msra.mxu0 0.0
  %2040 = vmatprep.subr.mxu0 0.0
  %2041 = vmatpush1.msra.mxu0 0.0
  %2042 = vmatprep.subr.mxu0 0.0
  %2043 = vmatpush1.msra.mxu0 0.0
  %2044 = vmatprep.subr.mxu0 0.0
  %2045 = vmatpush1.msra.mxu0 0.0
  %2046 = vmatprep.subr.mxu0 0.0
  %2047 = vmatpush1.msra.mxu0 0.0
  %2048 = vmatprep.subr.mxu0 0.0
  %2049 = vmatpush1.msra.mxu0 0.0
  %2050 = vmatprep.subr.mxu0 0.0
  %2051 = vmatpush1.msra.mxu0 0.0
  %2052 = vmatprep.subr.mxu0 0.0
  %2053 = vmatpush1.msra.mxu0 0.0
  %2054 = vmatprep.subr.mxu0 0.0
  %2055 = vmatpush1.msra.mxu0 0.0
  %2056 = vmatprep.mubr.f32.mxu0 0.0
  %2057 = vmatmul.mubr.f32.gmra.mrb[0].mxu0 %v1988
  %v2058 = vpop.f32.mrb[0].mxu0
  %v2059 = vadd.f32 0.0, %v2058
  %v2060 = vpop.f32.mrb[0].mxu0
  %2061 = vmatprep.mubr.f32.mxu0 0.0
  %2062 = vmatmul.mubr.f32.gmra.mrb[0].mxu0 %v1990
  %v2063 = vpop.f32.mrb[0].mxu0
  %v2064 = vadd.f32 0.0, %v2063
  %v2065 = vpop.f32.mrb[0].mxu0
  %2066 = vdwg.mxu0
  %v2067 = vadd.f32 %v1265, %v2059
  %v2068 = vadd.f32 %v1270, %v2064
  %v2069 = vmul.f32 %v2067, 0.5
  %v2070 = vmul.f32 %v2068, 0.5
  %v2071 = vtanh.pop %v2069
  %v2072 = vtanh.pop %v2070
  %v2073 = vmul.f32 %v2071, 0.5
  %v2074 = vmul.f32 %v2072, 0.5
  %v2075 = vadd.f32 %v2073, 0.5
  %v2076 = vadd.f32 %v2074, 0.5
  %v2077 = vtanh.pop %v2067
  %v2078 = vtanh.pop %v2068
  %2081 = vrot.lane.b32.xlu0 %v2077, 64
  %v2082 = vpop.permute.xlu0 %2081
  %2083 = vrot.lane.b32.xlu0 %v2078, 64
  %v2084 = vpop.permute.xlu0 %2083
  %v2087 = vmul.f32 %v2075, %v2082
  %v2088 = vmul.f32 %v2076, %v2084
  %v2089 = vmul.f32 %v2075, %v1968
  %v2090 = vmul.f32 %v2076, %v1969
  %2093 = vrot.lane.b32.xlu0 %v2087, 32
  %v2094 = vpop.permute.xlu0 %2093
  %2095 = vrot.lane.b32.xlu0 %v2088, 32
  %v2096 = vpop.permute.xlu0 %2095
  %v2099 = vadd.f32 %v2089, %v2094
  %v2100 = vadd.f32 %v2090, %v2096
  %v2101 = vtanh.pop %v2099
  %v2102 = vtanh.pop %v2100
  %2105 = vrot.lane.b32.xlu0 %v2101, 64
  %v2106 = vpop.permute.xlu0 %2105
  %2107 = vrot.lane.b32.xlu0 %v2102, 64
  %v2108 = vpop.permute.xlu0 %2107
  %v2111 = vmul.f32 %v2075, %v2106
  %v2112 = vmul.f32 %v2076, %v2108
  %2115 = vrot.lane.b32.xlu0 %v2111, 32
  %v2116 = vpop.permute.xlu0 %2115
  %2117 = vrot.lane.b32.xlu0 %v2112, 32
  %v2118 = vpop.permute.xlu0 %2117
  %v2119 = vsel %vm837, %v2116, 0
  %v2121 = vsel %vm837, %v2118, 0
  %2123 = vmatprep.subr.mxu0 0.0
  %2124 = vmatpush1.msra.mxu0 %v1283
  %2125 = vmatprep.subr.mxu0 0.0
  %2126 = vmatpush1.msra.mxu0 %v1284
  %2127 = vmatprep.subr.mxu0 0.0
  %2128 = vmatpush1.msra.mxu0 %v1285
  %2129 = vmatprep.subr.mxu0 0.0
  %2130 = vmatpush1.msra.mxu0 %v1286
  %2131 = vmatprep.subr.mxu0 0.0
  %2132 = vmatpush1.msra.mxu0 0.0
  %2133 = vmatprep.subr.mxu0 0.0
  %2134 = vmatpush1.msra.mxu0 0.0
  %2135 = vmatprep.subr.mxu0 0.0
  %2136 = vmatpush1.msra.mxu0 0.0
  %2137 = vmatprep.subr.mxu0 0.0
  %2138 = vmatpush1.msra.mxu0 0.0
  %2139 = vmatprep.subr.mxu0 0.0
  %2140 = vmatpush1.msra.mxu0 0.0
  %2141 = vmatprep.subr.mxu0 0.0
  %2142 = vmatpush1.msra.mxu0 0.0
  %2143 = vmatprep.subr.mxu0 0.0
  %2144 = vmatpush1.msra.mxu0 0.0
  %2145 = vmatprep.subr.mxu0 0.0
  %2146 = vmatpush1.msra.mxu0 0.0
  %2147 = vmatprep.subr.mxu0 0.0
  %2148 = vmatpush1.msra.mxu0 0.0
  %2149 = vmatprep.subr.mxu0 0.0
  %2150 = vmatpush1.msra.mxu0 0.0
  %2151 = vmatprep.subr.mxu0 0.0
  %2152 = vmatpush1.msra.mxu0 0.0
  %2153 = vmatprep.subr.mxu0 0.0
  %2154 = vmatpush1.msra.mxu0 0.0
  %2155 = vmatprep.subr.mxu0 0.0
  %2156 = vmatpush1.msra.mxu0 0.0
  %2157 = vmatprep.subr.mxu0 0.0
  %2158 = vmatpush1.msra.mxu0 0.0
  %2159 = vmatprep.subr.mxu0 0.0
  %2160 = vmatpush1.msra.mxu0 0.0
  %2161 = vmatprep.subr.mxu0 0.0
  %2162 = vmatpush1.msra.mxu0 0.0
  %2163 = vmatprep.subr.mxu0 0.0
  %2164 = vmatpush1.msra.mxu0 0.0
  %2165 = vmatprep.subr.mxu0 0.0
  %2166 = vmatpush1.msra.mxu0 0.0
  %2167 = vmatprep.subr.mxu0 0.0
  %2168 = vmatpush1.msra.mxu0 0.0
  %2169 = vmatprep.subr.mxu0 0.0
  %2170 = vmatpush1.msra.mxu0 0.0
  %2171 = vmatprep.subr.mxu0 0.0
  %2172 = vmatpush1.msra.mxu0 0.0
  %2173 = vmatprep.subr.mxu0 0.0
  %2174 = vmatpush1.msra.mxu0 0.0
  %2175 = vmatprep.subr.mxu0 0.0
  %2176 = vmatpush1.msra.mxu0 0.0
  %2177 = vmatprep.subr.mxu0 0.0
  %2178 = vmatpush1.msra.mxu0 0.0
  %2179 = vmatprep.subr.mxu0 0.0
  %2180 = vmatpush1.msra.mxu0 0.0
  %2181 = vmatprep.subr.mxu0 0.0
  %2182 = vmatpush1.msra.mxu0 0.0
  %2183 = vmatprep.subr.mxu0 0.0
  %2184 = vmatpush1.msra.mxu0 0.0
  %2185 = vmatprep.subr.mxu0 0.0
  %2186 = vmatpush1.msra.mxu0 0.0
  %2187 = vmatprep.mubr.f32.mxu0 0.0
  %2188 = vmatmul.mubr.f32.gmra.mrb[0].mxu0 %v2119
  %v2189 = vpop.f32.mrb[0].mxu0
  %v2190 = vadd.f32 0.0, %v2189
  %v2191 = vpop.f32.mrb[0].mxu0
  %2192 = vmatprep.mubr.f32.mxu0 0.0
  %2193 = vmatmul.mubr.f32.gmra.mrb[0].mxu0 %v2121
  %v2194 = vpop.f32.mrb[0].mxu0
  %v2195 = vadd.f32 0.0, %v2194
  %v2196 = vpop.f32.mrb[0].mxu0
  %2197 = vdwg.mxu0
  %v2198 = vadd.f32 %v1275, %v2190
  %v2199 = vadd.f32 %v1280, %v2195
  %v2200 = vmul.f32 %v2198, 0.5
  %v2201 = vmul.f32 %v2199, 0.5
  %v2202 = vtanh.pop %v2200
  %v2203 = vtanh.pop %v2201
  %v2204 = vmul.f32 %v2202, 0.5
  %v2205 = vmul.f32 %v2203, 0.5
  %v2206 = vadd.f32 %v2204, 0.5
  %v2207 = vadd.f32 %v2205, 0.5
  %v2208 = vtanh.pop %v2198
  %v2209 = vtanh.pop %v2199
  %2212 = vrot.lane.b32.xlu0 %v2208, 64
  %v2213 = vpop.permute.xlu0 %2212
  %2214 = vrot.lane.b32.xlu0 %v2209, 64
  %v2215 = vpop.permute.xlu0 %2214
  %v2218 = vmul.f32 %v2206, %v2213
  %v2219 = vmul.f32 %v2207, %v2215
  %v2220 = vmul.f32 %v2206, %v2099
  %v2221 = vmul.f32 %v2207, %v2100
  %2224 = vrot.lane.b32.xlu0 %v2218, 32
  %v2225 = vpop.permute.xlu0 %2224
  %2226 = vrot.lane.b32.xlu0 %v2219, 32
  %v2227 = vpop.permute.xlu0 %2226
  %v2230 = vadd.f32 %v2220, %v2225
  %v2231 = vadd.f32 %v2221, %v2227
  %v2232 = vtanh.pop %v2230
  %v2233 = vtanh.pop %v2231
  %2236 = vrot.lane.b32.xlu0 %v2232, 64
  %v2237 = vpop.permute.xlu0 %2236
  %2238 = vrot.lane.b32.xlu0 %v2233, 64
  %v2239 = vpop.permute.xlu0 %2238
  %v2242 = vmul.f32 %v2206, %v2237
  %v2243 = vmul.f32 %v2207, %v2239
  %v2244 = vld [vmem:[%s11] sm:$0x1]
  %v2246 = vlaneseq
  %v2247 = vshrl.u32 %v2246, 7
  %v2248 = vsub.s32 0, %v2247
  %v2249 = vrot.slane %v2244, %v2248
  %2250 = vrot.lane.b32.xlu0 %v2249, 96
  %v2251 = vpop.permute.xlu0 %2250
  %v2253 = vmul.f32 %v2242, %v2251
  %v2254 = vmul.f32 %v2243, %v2251
  %2257 = vrot.lane.b32.xlu0 %v2253, 32
  %v2258 = vpop.permute.xlu0 %2257
  %2259 = vrot.lane.b32.xlu0 %v2254, 32
  %v2260 = vpop.permute.xlu0 %2259
  %v2263 = vsel %vm837, %v2258, 0.0
  %2264 = vadd.xlane.f32.xlu0 %v2263
  %v2265 = vpop.xlane.xlu0 %2264
  %v2266 = vsel %vm837, %v2260, 0.0
  %2267 = vadd.xlane.f32.xlu0 %v2266
  %v2268 = vpop.xlane.xlu0 %2267
  %v2269 = vld [vmem:[#allocation2] sm:$0x1]
  %v2271 = vlaneseq
  %v2272 = vshrl.u32 %v2271, 7
  %v2273 = vsub.s32 0, %v2272
  %v2274 = vrot.slane %v2269, %v2273
  %v2276 = vadd.f32 %v2265, %v2274
  %v2277 = vadd.f32 %v2268, %v2274
  %vm2278 = vcmask 7168
  %2279 = vst.msk [vmem:[%s13] sm:$0xff] %vm2278, %v2276
  %2280 = vst.msk [vmem:[%s13 + $0x8] sm:$0xff] %vm2278, %v2277
  // Predicated region
  $region54: #{_lambda_.1} parent=0 // pred_check
    _
  $region55: #{_lambda_.1} parent=0 // pred_check_branch
    %2282 = sbr.rel (0) target = $region57
  $region56: #{_lambda_.1} parent=0 // pred_region
    _
  $region57: #{_lambda_.1} parent=0 // pred_fallthru
    _
  // Predicated region
  $region58: #{_lambda_.1} parent=0 // pred_check
    _
  $region59: #{_lambda_.1} parent=0 // pred_check_branch
    %2284 = sbr.rel (0) target = $region61
  $region60: #{_lambda_.1} parent=0 // pred_region
    _
  $region61: #{_lambda_.1} parent=0 // pred_fallthru
    _

</llo_original>
